<compile_context>
chip_gen: v6e
topology: v6e:2x2x1
jax: 0.10.0
libtpu: 0.0.40
codegen_flags: <defaults>
</compile_context>

<pallas_src>
import functools

import jax
import jax.numpy as jnp
from jax import lax
from jax.experimental import pallas as pl
from jax.experimental.pallas import tpu as pltpu


# ----------------------------------------------------------------------------
# Fused episode kernel (support + query, K-tiled contraction)
# ----------------------------------------------------------------------------

def _episode_kernel(xs_ref, xq_ref, w_ref, b_ref, onehot_ref,
                    sfeat_ref, proto_ref, psq_ref, qfeat_ref,
                    score_ref, cos_ref,
                    sacc_ref, qacc_ref, *, use_softmax):
    """grid=(K//tk,): accumulate both backbone matmuls over K tiles, then run the
    prototype / distance / softmax / cosine epilogue on the last tile."""
    k = pl.program_id(0)

    @pl.when(k == 0)
    def _init():
        sacc_ref[...] = jnp.zeros_like(sacc_ref)
        qacc_ref[...] = jnp.zeros_like(qacc_ref)

    # bf16 x / bf16 w on the MXU, f32 accumulation in VMEM scratch.
    w = w_ref[...]
    sacc_ref[...] += jnp.dot(xs_ref[...], w, preferred_element_type=jnp.float32)
    qacc_ref[...] += jnp.dot(xq_ref[...], w, preferred_element_type=jnp.float32)

    @pl.when(k == pl.num_programs(0) - 1)
    def _epilogue():
        b = b_ref[...]
        sfeat = jnp.maximum(sacc_ref[...] + b, 0.0)          # (n_sup, D) f32
        qfeat = jnp.maximum(qacc_ref[...] + b, 0.0)          # (nq, D)    f32
        sfeat_ref[...] = sfeat
        qfeat_ref[...] = qfeat

        # Prototypes: one-hot already scaled by 1/count on the host.
        protos = jnp.dot(onehot_ref[...], sfeat,
                         preferred_element_type=jnp.float32)  # (n_way, D)
        proto_ref[...] = protos

        # ||p||^2 as a (1, n_way) row via a tiny MXU contraction (no transpose).
        ones_row = jnp.ones((1, protos.shape[1]), jnp.float32)
        psq = lax.dot_general(ones_row, protos * protos,
                              dimension_numbers=(((1,), (1,)), ((), ())),
                              preferred_element_type=jnp.float32)  # (1, n_way)
        psq_ref[...] = psq

        qsq = jnp.sum(qfeat * qfeat, axis=1, keepdims=True)   # (nq, 1)
        qp = lax.dot_general(qfeat, protos,
                             dimension_numbers=(((1,), (1,)), ((), ())),
                             preferred_element_type=jnp.float32)  # (nq, n_way)

        # L2 logits via the MXU expansion, clamp-at-0 before sqrt.
        d2 = jnp.maximum(qsq + psq - 2.0 * qp, 0.0)
        logits = -jnp.sqrt(d2)
        if use_softmax:
            m = jnp.max(logits, axis=-1, keepdims=True)
            e = jnp.exp(logits - m)
            logits = e * pl.reciprocal(jnp.sum(e, axis=-1, keepdims=True),
                                       approx=True)
        score_ref[...] = logits

        # Cosine logits reuse the q.p matmul; rsqrt goes to the EUP.
        eps = 1e-12
        cos_ref[...] = (qp
                        * lax.rsqrt(jnp.maximum(qsq, eps))
                        * lax.rsqrt(jnp.maximum(psq, eps)))


def _pick_tk(k_dim, preferred=1024):
    for tk in (preferred, 512, 256, 128):
        if k_dim % tk == 0:
            return tk
    return k_dim  # fall back to a single tile


def episode_forward(xs, xq, w, b, onehot_scaled, *, use_softmax):
    """One fused pallas_call for a whole episode.

    xs: (n_sup, K) bf16, xq: (nq, K) bf16, w: (K, D) bf16, b: (1, D) f32,
    onehot_scaled: (n_way, n_sup) f32 with rows summing to 1.
    Returns (support_feats, prototypes, proto_sq_row, query_feats, scores, cos).
    """
    n_sup, k_dim = xs.shape
    nq = xq.shape[0]
    d = w.shape[1]
    n_way = onehot_scaled.shape[0]
    tk = _pick_tk(k_dim)
    kernel = functools.partial(_episode_kernel, use_softmax=use_softmax)

    return pl.pallas_call(
        kernel,
        out_shape=(
            jax.ShapeDtypeStruct((n_sup, d), jnp.float32),    # support features
            jax.ShapeDtypeStruct((n_way, d), jnp.float32),    # prototypes
            jax.ShapeDtypeStruct((1, n_way), jnp.float32),    # ||p||^2 row
            jax.ShapeDtypeStruct((nq, d), jnp.float32),       # query features
            jax.ShapeDtypeStruct((nq, n_way), jnp.float32),   # scores
            jax.ShapeDtypeStruct((nq, n_way), jnp.float32),   # cosine logits
        ),
        grid=(k_dim // tk,),
        in_specs=[
            pl.BlockSpec((n_sup, tk), lambda k: (0, k)),      # support x tile
            pl.BlockSpec((nq, tk), lambda k: (0, k)),         # query x tile
            pl.BlockSpec((tk, d), lambda k: (k, 0)),          # weight tile
            pl.BlockSpec((1, d), lambda k: (0, 0)),           # bias (fetched once)
            pl.BlockSpec((n_way, n_sup), lambda k: (0, 0)),   # scaled one-hot
        ],
        out_specs=[
            pl.BlockSpec((n_sup, d), lambda k: (0, 0)),
            pl.BlockSpec((n_way, d), lambda k: (0, 0)),
            pl.BlockSpec((1, n_way), lambda k: (0, 0)),
            pl.BlockSpec((nq, d), lambda k: (0, 0)),
            pl.BlockSpec((nq, n_way), lambda k: (0, 0)),
            pl.BlockSpec((nq, n_way), lambda k: (0, 0)),
        ],
        scratch_shapes=[pltpu.VMEM((n_sup, d), jnp.float32),
                        pltpu.VMEM((nq, d), jnp.float32)],
        compiler_params=pltpu.CompilerParams(
            dimension_semantics=("arbitrary",)),
    )(xs, xq, w, b, onehot_scaled)


# ----------------------------------------------------------------------------
# Standalone feature-space distances (API parity; not used on the hot path)
# ----------------------------------------------------------------------------

def _feature_logits_kernel(q_ref, p_ref, psq_ref, l2_ref, cos_ref):
    q = q_ref[...]
    protos = p_ref[...]
    psq = psq_ref[...]
    qsq = jnp.sum(q * q, axis=1, keepdims=True)
    qp = lax.dot_general(q, protos,
                         dimension_numbers=(((1,), (1,)), ((), ())),
                         preferred_element_type=jnp.float32)
    l2_ref[...] = -jnp.sqrt(jnp.maximum(qsq + psq - 2.0 * qp, 0.0))
    eps = 1e-12
    cos_ref[...] = (qp * lax.rsqrt(jnp.maximum(qsq, eps))
                       * lax.rsqrt(jnp.maximum(psq, eps)))


def feature_logits(samples, prototypes, proto_sq_row):
    nq, d = samples.shape
    n_way = prototypes.shape[0]
    full = lambda s: pl.BlockSpec(s, lambda i: tuple(0 for _ in s))
    return pl.pallas_call(
        _feature_logits_kernel,
        out_shape=(jax.ShapeDtypeStruct((nq, n_way), jnp.float32),
                   jax.ShapeDtypeStruct((nq, n_way), jnp.float32)),
        grid=(1,),
        in_specs=[full((nq, d)), full((n_way, d)), full((1, n_way))],
        out_specs=[full((nq, n_way)), full((nq, n_way))],
    )(samples.astype(jnp.float32), prototypes, proto_sq_row)


# ----------------------------------------------------------------------------
# FewShotClassifier (mirrors PyTorchFewShotClassifier semantics)
# ----------------------------------------------------------------------------

class PallasFewShotClassifier:
    def __init__(self, backbone_w, backbone_b, use_softmax: bool = False):
        # Weight kept resident in HBM as bf16 (halves the dominant HBM stream).
        self._w = backbone_w.astype(jnp.bfloat16)
        self._b = backbone_b.astype(jnp.float32).reshape(1, -1)
        self.use_softmax = use_softmax
        # feature_dimension derived statically from the weight (no probe call).
        self.backbone_output_shape = (int(backbone_w.shape[1]),)
        self.feature_dimension = self.backbone_output_shape[0]
        self.prototypes = None
        self.support_features = None
        self.support_labels = None
        self._proto_sq_row = None          # (1, n_way) cached ||p||^2
        self._support_x = None             # flattened bf16 support images
        self._onehot_scaled = None         # (n_way, n_sup) rows sum to 1
        self.last_query_features = None
        self.last_cosine_logits = None

    @staticmethod
    def _flatten(images):
        # NCHW -> (N, C*H*W), bf16 feed for the MXU (f32 accumulation in-kernel).
        return images.reshape(images.shape[0], -1).astype(jnp.bfloat16)

    def process_support_set(self, support_images, support_labels, n_way=None):
        self.store_support_set_data(support_images, support_labels, n_way)

    def store_support_set_data(self, support_images, support_labels, n_way=None):
        """Stores support data; features / prototypes are materialized by the
        fused episode kernel on the first forward() so the backbone weight is
        streamed exactly once per episode (perf-review item 1a)."""
        self.support_labels = support_labels
        if n_way is None:
            # Fallback (host sync); prefer passing n_way as a static int.
            n_way = int(jnp.max(support_labels)) + 1
        onehot = (support_labels[None, :] ==
                  jnp.arange(n_way)[:, None]).astype(jnp.float32)
        counts = jnp.maximum(jnp.sum(onehot, axis=1, keepdims=True), 1.0)
        self._onehot_scaled = onehot / counts          # 1/count folded on host
        self._support_x = self._flatten(support_images)
        self.prototypes = None
        self.support_features = None
        self._proto_sq_row = None

    def forward(self, query_images):
        # Single fused pallas_call: support backbone + prototypes + query
        # backbone + L2 logits (+ optional softmax) + cosine logits.
        xq = self._flatten(query_images)
        (sfeat, protos, psq, qfeat, scores, cos) = episode_forward(
            self._support_x, xq, self._w, self._b, self._onehot_scaled,
            use_softmax=self.use_softmax)
        self.support_features = sfeat
        self.prototypes = protos
        self._proto_sq_row = psq
        self.last_query_features = qfeat
        self.last_cosine_logits = cos
        return scores

    # --- feature-space helpers (API parity; the hot path is fused above) -----
    def l2_distance_to_prototypes(self, samples):
        return feature_logits(samples, self.prototypes, self._proto_sq_row)[0]

    def cosine_distance_to_prototypes(self, samples):
        return feature_logits(samples, self.prototypes, self._proto_sq_row)[1]

    def softmax_if_specified(self, output):
        return jax.nn.softmax(output, -1) if self.use_softmax else output

    @staticmethod
    def is_transductive() -> bool:
        return False


# ----------------------------------------------------------------------------
# main
# ----------------------------------------------------------------------------

if __name__ == "__main__":
    key = jax.random.PRNGKey(0)
    k_w, k_b, k_sup, k_qry = jax.random.split(key, 4)

    C, H, W = 3, 32, 32
    D = 64                      # feature dimension
    N_WAY, K_SHOT = 5, 2
    N_SUP = N_WAY * K_SHOT      # 10 support images
    N_QRY = 8                   # 8 query images

    # Deterministic backbone parameters (Linear 3072 -> 64, ReLU).
    backbone_w = jax.random.normal(k_w, (C * H * W, D), jnp.float32) * 0.02
    backbone_b = jax.random.normal(k_b, (1, D), jnp.float32) * 0.1

    support_images = jax.random.normal(k_sup, (N_SUP, C, H, W), jnp.float32)
    support_labels = jnp.array([0, 0, 1, 1, 2, 2, 3, 3, 4, 4], jnp.int32)
    query_images = jax.random.normal(k_qry, (N_QRY, C, H, W), jnp.float32)

    clf = PallasFewShotClassifier(backbone_w, backbone_b, use_softmax=True)
    clf.process_support_set(support_images, support_labels, n_way=N_WAY)

    scores = clf.forward(query_images)        # 1 fused pallas_call per episode
    cosine = clf.last_cosine_logits           # produced by the same call
    qfeats = clf.last_query_features
    jax.block_until_ready((scores, cosine, qfeats))

    # Pure-JAX reference (same bf16 matmul inputs, f32 accumulation + epilogue).
    def ref_backbone(imgs):
        x = imgs.reshape(imgs.shape[0], -1).astype(jnp.bfloat16)
        y = jnp.dot(x, backbone_w.astype(jnp.bfloat16),
                    preferred_element_type=jnp.float32)
        return jnp.maximum(y + backbone_b, 0.0)

    sf_ref = ref_backbone(support_images)
    onehot = (support_labels[None, :] ==
              jnp.arange(N_WAY)[:, None]).astype(jnp.float32)
    protos_ref = (onehot @ sf_ref) / jnp.sum(onehot, axis=1, keepdims=True)
    qf_ref = ref_backbone(query_images)
    dist = jnp.sqrt(jnp.sum((qf_ref[:, None, :] - protos_ref[None, :, :]) ** 2,
                            axis=-1))
    ref_scores = jax.nn.softmax(-dist, axis=-1)
    qn = qf_ref / jnp.maximum(jnp.linalg.norm(qf_ref, axis=1, keepdims=True), 1e-12)
    pn = protos_ref / jnp.maximum(jnp.linalg.norm(protos_ref, axis=1, keepdims=True),
                                  1e-12)
    ref_cos = qn @ pn.T

    assert scores.shape == (N_QRY, N_WAY) and cosine.shape == (N_QRY, N_WAY)
    assert jnp.allclose(clf.support_features, sf_ref, atol=2e-3, rtol=2e-3)
    assert jnp.allclose(clf.prototypes, protos_ref, atol=2e-3, rtol=2e-3)
    assert jnp.allclose(qfeats, qf_ref, atol=2e-3, rtol=2e-3)
    assert jnp.allclose(scores, ref_scores, atol=2e-3, rtol=2e-3)
    assert jnp.allclose(cosine, ref_cos, atol=2e-3, rtol=2e-3)

    print("KERNEL_OK")
</pallas_src>

<mosaic_0001>
module attributes {stable_mosaic.version = 11 : i64} {
  func.func @_episode_kernel(%arg0: i32, %arg1: memref<10x1024xbf16, #tpu.memory_space<vmem>>, %arg2: memref<8x1024xbf16, #tpu.memory_space<vmem>>, %arg3: memref<1024x64xbf16, #tpu.memory_space<vmem>>, %arg4: memref<1x64xf32, #tpu.memory_space<vmem>>, %arg5: memref<5x10xf32, #tpu.memory_space<vmem>>, %arg6: memref<10x64xf32, #tpu.memory_space<vmem>>, %arg7: memref<5x64xf32, #tpu.memory_space<vmem>>, %arg8: memref<1x5xf32, #tpu.memory_space<vmem>>, %arg9: memref<8x64xf32, #tpu.memory_space<vmem>>, %arg10: memref<8x5xf32, #tpu.memory_space<vmem>>, %arg11: memref<8x5xf32, #tpu.memory_space<vmem>>, %arg12: memref<10x64xf32, #tpu.memory_space<vmem>>, %arg13: memref<8x64xf32, #tpu.memory_space<vmem>>) attributes {dimension_semantics = [#tpu.dimension_semantics<arbitrary>], iteration_bounds = array<i64: 3>, scalar_prefetch = 0 : i64, scratch_operands = 2 : i64, tpu.core_type = #tpu.core_type<tc>, window_params = [{transform_indices = @transform_0, window_bounds = array<i64: 10, 1024>}, {transform_indices = @transform_1, window_bounds = array<i64: 8, 1024>}, {transform_indices = @transform_2, window_bounds = array<i64: 1024, 64>}, {pipeline_mode = #tpu.pipeline_mode<synchronous>, transform_indices = @transform_3, window_bounds = array<i64: 1, 64>}, {pipeline_mode = #tpu.pipeline_mode<synchronous>, transform_indices = @transform_4, window_bounds = array<i64: 5, 10>}, {pipeline_mode = #tpu.pipeline_mode<synchronous>, transform_indices = @transform_5, window_bounds = array<i64: 10, 64>}, {pipeline_mode = #tpu.pipeline_mode<synchronous>, transform_indices = @transform_6, window_bounds = array<i64: 5, 64>}, {pipeline_mode = #tpu.pipeline_mode<synchronous>, transform_indices = @transform_7, window_bounds = array<i64: 1, 5>}, {pipeline_mode = #tpu.pipeline_mode<synchronous>, transform_indices = @transform_8, window_bounds = array<i64: 8, 64>}, {pipeline_mode = #tpu.pipeline_mode<synchronous>, transform_indices = @transform_9, window_bounds = array<i64: 8, 5>}, {pipeline_mode = #tpu.pipeline_mode<synchronous>, transform_indices = @transform_10, window_bounds = array<i64: 8, 5>}]} {
    %c0_i32 = arith.constant 0 : i32
    %0 = arith.cmpi eq, %arg0, %c0_i32 : i32
    %1 = arith.extui %0 : i1 to i32
    %c0_i32_0 = arith.constant 0 : i32
    %2 = arith.cmpi ne, %1, %c0_i32_0 : i32
    scf.if %2 {
      %cst_16 = arith.constant 0.000000e+00 : f32
      %17 = vector.broadcast %cst_16 : f32 to vector<10x64xf32>
      %c0_17 = arith.constant 0 : index
      %c0_18 = arith.constant 0 : index
      %18 = vector.load %arg12[%c0_17, %c0_18] : memref<10x64xf32, #tpu.memory_space<vmem>>, vector<10x64xf32>
      tpu.vector_store %arg12[%c0_17, %c0_18], %17 {strides = array<i32>} : memref<10x64xf32, #tpu.memory_space<vmem>>, vector<10x64xf32>,
      %cst_19 = arith.constant 0.000000e+00 : f32
      %19 = vector.broadcast %cst_19 : f32 to vector<8x64xf32>
      %c0_20 = arith.constant 0 : index
      %c0_21 = arith.constant 0 : index
      %20 = vector.load %arg13[%c0_20, %c0_21] : memref<8x64xf32, #tpu.memory_space<vmem>>, vector<8x64xf32>
      tpu.vector_store %arg13[%c0_20, %c0_21], %19 {strides = array<i32>} : memref<8x64xf32, #tpu.memory_space<vmem>>, vector<8x64xf32>,
    } else {
    }
    %c0 = arith.constant 0 : index
    %c0_1 = arith.constant 0 : index
    %3 = vector.load %arg3[%c0, %c0_1] : memref<1024x64xbf16, #tpu.memory_space<vmem>>, vector<1024x64xbf16>
    %c0_2 = arith.constant 0 : index
    %c0_3 = arith.constant 0 : index
    %4 = vector.load %arg12[%c0_2, %c0_3] : memref<10x64xf32, #tpu.memory_space<vmem>>, vector<10x64xf32>
    %c0_4 = arith.constant 0 : index
    %c0_5 = arith.constant 0 : index
    %5 = vector.load %arg1[%c0_4, %c0_5] : memref<10x1024xbf16, #tpu.memory_space<vmem>>, vector<10x1024xbf16>
    %cst = arith.constant dense<0.000000e+00> : vector<10x64xf32>
    %6 = tpu.matmul %5, %3, %cst {dimension_numbers = #tpu.dot_dimension_numbers<[1], [0], [0], [1], [0, 0, 1, 1], [], []>} : vector<10x1024xbf16>, vector<1024x64xbf16>, vector<10x64xf32> -> vector<10x64xf32>
    %7 = arith.addf %4, %6 : vector<10x64xf32>
    %c0_6 = arith.constant 0 : index
    %c0_7 = arith.constant 0 : index
    %8 = vector.load %arg12[%c0_6, %c0_7] : memref<10x64xf32, #tpu.memory_space<vmem>>, vector<10x64xf32>
    tpu.vector_store %arg12[%c0_6, %c0_7], %7 {strides = array<i32>} : memref<10x64xf32, #tpu.memory_space<vmem>>, vector<10x64xf32>,
    %c0_8 = arith.constant 0 : index
    %c0_9 = arith.constant 0 : index
    %9 = vector.load %arg13[%c0_8, %c0_9] : memref<8x64xf32, #tpu.memory_space<vmem>>, vector<8x64xf32>
    %c0_10 = arith.constant 0 : index
    %c0_11 = arith.constant 0 : index
    %10 = vector.load %arg2[%c0_10, %c0_11] : memref<8x1024xbf16, #tpu.memory_space<vmem>>, vector<8x1024xbf16>
    %cst_12 = arith.constant dense<0.000000e+00> : vector<8x64xf32>
    %11 = tpu.matmul %10, %3, %cst_12 {dimension_numbers = #tpu.dot_dimension_numbers<[1], [0], [0], [1], [0, 0, 1, 1], [], []>} : vector<8x1024xbf16>, vector<1024x64xbf16>, vector<8x64xf32> -> vector<8x64xf32>
    %12 = arith.addf %9, %11 : vector<8x64xf32>
    %c0_13 = arith.constant 0 : index
    %c0_14 = arith.constant 0 : index
    %13 = vector.load %arg13[%c0_13, %c0_14] : memref<8x64xf32, #tpu.memory_space<vmem>>, vector<8x64xf32>
    tpu.vector_store %arg13[%c0_13, %c0_14], %12 {strides = array<i32>} : memref<8x64xf32, #tpu.memory_space<vmem>>, vector<8x64xf32>,
    %c2_i32 = arith.constant 2 : i32
    %14 = arith.cmpi eq, %arg0, %c2_i32 : i32
    %15 = arith.extui %14 : i1 to i32
    %c0_i32_15 = arith.constant 0 : i32
    %16 = arith.cmpi ne, %15, %c0_i32_15 : i32
    scf.if %16 {
      %c0_16 = arith.constant 0 : index
      %c0_17 = arith.constant 0 : index
      %17 = vector.load %arg4[%c0_16, %c0_17] : memref<1x64xf32, #tpu.memory_space<vmem>>, vector<1x64xf32>
      %c0_18 = arith.constant 0 : index
      %c0_19 = arith.constant 0 : index
      %18 = vector.load %arg12[%c0_18, %c0_19] : memref<10x64xf32, #tpu.memory_space<vmem>>, vector<10x64xf32>
      %19 = vector.broadcast %17 : vector<1x64xf32> to vector<10x64xf32>
      %20 = arith.addf %18, %19 : vector<10x64xf32>
      %cst_20 = arith.constant 0.000000e+00 : f32
      %21 = vector.broadcast %cst_20 : f32 to vector<10x64xf32>
      %22 = arith.maximumf %20, %21 : vector<10x64xf32>
      %c0_21 = arith.constant 0 : index
      %c0_22 = arith.constant 0 : index
      %23 = vector.load %arg13[%c0_21, %c0_22] : memref<8x64xf32, #tpu.memory_space<vmem>>, vector<8x64xf32>
      %24 = vector.broadcast %17 : vector<1x64xf32> to vector<8x64xf32>
      %25 = arith.addf %23, %24 : vector<8x64xf32>
      %cst_23 = arith.constant 0.000000e+00 : f32
      %26 = vector.broadcast %cst_23 : f32 to vector<8x64xf32>
      %27 = arith.maximumf %25, %26 : vector<8x64xf32>
      %c0_24 = arith.constant 0 : index
      %c0_25 = arith.constant 0 : index
      %28 = vector.load %arg6[%c0_24, %c0_25] : memref<10x64xf32, #tpu.memory_space<vmem>>, vector<10x64xf32>
      tpu.vector_store %arg6[%c0_24, %c0_25], %22 {strides = array<i32>} : memref<10x64xf32, #tpu.memory_space<vmem>>, vector<10x64xf32>,
      %c0_26 = arith.constant 0 : index
      %c0_27 = arith.constant 0 : index
      %29 = vector.load %arg9[%c0_26, %c0_27] : memref<8x64xf32, #tpu.memory_space<vmem>>, vector<8x64xf32>
      tpu.vector_store %arg9[%c0_26, %c0_27], %27 {strides = array<i32>} : memref<8x64xf32, #tpu.memory_space<vmem>>, vector<8x64xf32>,
      %c0_28 = arith.constant 0 : index
      %c0_29 = arith.constant 0 : index
      %30 = vector.load %arg5[%c0_28, %c0_29] : memref<5x10xf32, #tpu.memory_space<vmem>>, vector<5x10xf32>
      %cst_30 = arith.constant dense<0.000000e+00> : vector<5x64xf32>
      %31 = tpu.matmul %30, %22, %cst_30 {dimension_numbers = #tpu.dot_dimension_numbers<[1], [0], [0], [1], [0, 0, 1, 1], [], []>} : vector<5x10xf32>, vector<10x64xf32>, vector<5x64xf32> -> vector<5x64xf32>
      %c0_31 = arith.constant 0 : index
      %c0_32 = arith.constant 0 : index
      %32 = vector.load %arg7[%c0_31, %c0_32] : memref<5x64xf32, #tpu.memory_space<vmem>>, vector<5x64xf32>
      tpu.vector_store %arg7[%c0_31, %c0_32], %31 {strides = array<i32>} : memref<5x64xf32, #tpu.memory_space<vmem>>, vector<5x64xf32>,
      %cst_33 = arith.constant 1.000000e+00 : f32
      %33 = vector.broadcast %cst_33 : f32 to vector<1x64xf32>
      %34 = arith.mulf %31, %31 : vector<5x64xf32>
      %cst_34 = arith.constant dense<0.000000e+00> : vector<1x5xf32>
      %35 = tpu.matmul %33, %34, %cst_34 {dimension_numbers = #tpu.dot_dimension_numbers<[1], [1], [0], [0], [0, 0, 1, 0], [], []>} : vector<1x64xf32>, vector<5x64xf32>, vector<1x5xf32> -> vector<1x5xf32>
      %c0_35 = arith.constant 0 : index
      %c0_36 = arith.constant 0 : index
      %36 = vector.load %arg8[%c0_35, %c0_36] : memref<1x5xf32, #tpu.memory_space<vmem>>, vector<1x5xf32>
      tpu.vector_store %arg8[%c0_35, %c0_36], %35 {strides = array<i32>} : memref<1x5xf32, #tpu.memory_space<vmem>>, vector<1x5xf32>,
      %37 = arith.mulf %27, %27 : vector<8x64xf32>
      %cst_37 = arith.constant dense<0.000000e+00> : vector<8xf32>
      %38 = vector.multi_reduction <add>, %37, %cst_37 [1] : vector<8x64xf32> to vector<8xf32>
      %39 = vector.shape_cast %38 : vector<8xf32> to vector<8x1xf32>
      %cst_38 = arith.constant dense<0.000000e+00> : vector<8x5xf32>
      %40 = tpu.matmul %27, %31, %cst_38 {dimension_numbers = #tpu.dot_dimension_numbers<[1], [1], [0], [0], [0, 0, 1, 0], [], []>} : vector<8x64xf32>, vector<5x64xf32>, vector<8x5xf32> -> vector<8x5xf32>
      %41 = vector.broadcast %39 : vector<8x1xf32> to vector<8x5xf32>
      %42 = vector.broadcast %35 : vector<1x5xf32> to vector<8x5xf32>
      %43 = arith.addf %41, %42 : vector<8x5xf32>
      %cst_39 = arith.constant 2.000000e+00 : f32
      %44 = vector.broadcast %cst_39 : f32 to vector<8x5xf32>
      %45 = arith.mulf %44, %40 : vector<8x5xf32>
      %46 = arith.subf %43, %45 : vector<8x5xf32>
      %cst_40 = arith.constant 0.000000e+00 : f32
      %47 = vector.broadcast %cst_40 : f32 to vector<8x5xf32>
      %48 = arith.maximumf %46, %47 : vector<8x5xf32>
      %49 = math.sqrt %48 : vector<8x5xf32>
      %cst_41 = arith.constant 0.000000e+00 : f32
      %50 = vector.broadcast %cst_41 : f32 to vector<8x5xf32>
      %51 = arith.subf %50, %49 : vector<8x5xf32>
      %cst_42 = arith.constant dense<0xFF800000> : vector<8xf32>
      %52 = vector.multi_reduction <maximumf>, %51, %cst_42 [1] : vector<8x5xf32> to vector<8xf32>
      %53 = vector.shape_cast %52 : vector<8xf32> to vector<8x1xf32>
      %54 = vector.broadcast %53 : vector<8x1xf32> to vector<8x5xf32>
      %55 = arith.subf %51, %54 : vector<8x5xf32>
      %56 = math.exp %55 : vector<8x5xf32>
      %cst_43 = arith.constant dense<0.000000e+00> : vector<8xf32>
      %57 = vector.multi_reduction <add>, %56, %cst_43 [1] : vector<8x5xf32> to vector<8xf32>
      %58 = vector.shape_cast %57 : vector<8xf32> to vector<8x1xf32>
      %59 = tpu.reciprocal %58 {approx = true} : vector<8x1xf32> -> vector<8x1xf32>
      %60 = vector.broadcast %59 : vector<8x1xf32> to vector<8x5xf32>
      %61 = arith.mulf %56, %60 : vector<8x5xf32>
      %c0_44 = arith.constant 0 : index
      %c0_45 = arith.constant 0 : index
      %62 = vector.load %arg10[%c0_44, %c0_45] : memref<8x5xf32, #tpu.memory_space<vmem>>, vector<8x5xf32>
      tpu.vector_store %arg10[%c0_44, %c0_45], %61 {strides = array<i32>} : memref<8x5xf32, #tpu.memory_space<vmem>>, vector<8x5xf32>,
      %cst_46 = arith.constant 9.99999996E-13 : f32
      %63 = vector.broadcast %cst_46 : f32 to vector<8x1xf32>
      %64 = arith.maximumf %39, %63 : vector<8x1xf32>
      %65 = math.rsqrt %64 : vector<8x1xf32>
      %66 = vector.broadcast %65 : vector<8x1xf32> to vector<8x5xf32>
      %67 = arith.mulf %40, %66 : vector<8x5xf32>
      %cst_47 = arith.constant 9.99999996E-13 : f32
      %68 = vector.broadcast %cst_47 : f32 to vector<1x5xf32>
      %69 = arith.maximumf %35, %68 : vector<1x5xf32>
      %70 = math.rsqrt %69 : vector<1x5xf32>
      %71 = vector.broadcast %70 : vector<1x5xf32> to vector<8x5xf32>
      %72 = arith.mulf %67, %71 : vector<8x5xf32>
      %c0_48 = arith.constant 0 : index
      %c0_49 = arith.constant 0 : index
      %73 = vector.load %arg11[%c0_48, %c0_49] : memref<8x5xf32, #tpu.memory_space<vmem>>, vector<8x5xf32>
      tpu.vector_store %arg11[%c0_48, %c0_49], %72 {strides = array<i32>} : memref<8x5xf32, #tpu.memory_space<vmem>>, vector<8x5xf32>,
    } else {
    }
    return
  }
  func.func @transform_0(%arg0: i32) -> (i32, i32) {
    %c0_i32 = arith.constant 0 : i32
    %c0_i32_0 = arith.constant 0 : i32
    return %c0_i32, %arg0 : i32, i32
  }
  func.func @transform_1(%arg0: i32) -> (i32, i32) {
    %c0_i32 = arith.constant 0 : i32
    %c0_i32_0 = arith.constant 0 : i32
    return %c0_i32, %arg0 : i32, i32
  }
  func.func @transform_2(%arg0: i32) -> (i32, i32) {
    %c0_i32 = arith.constant 0 : i32
    %c0_i32_0 = arith.constant 0 : i32
    return %arg0, %c0_i32 : i32, i32
  }
  func.func @transform_3(%arg0: i32) -> (i32, i32) {
    %c0_i32 = arith.constant 0 : i32
    %c0_i32_0 = arith.constant 0 : i32
    %c0_i32_1 = arith.constant 0 : i32
    return %c0_i32, %c0_i32_0 : i32, i32
  }
  func.func @transform_4(%arg0: i32) -> (i32, i32) {
    %c0_i32 = arith.constant 0 : i32
    %c0_i32_0 = arith.constant 0 : i32
    %c0_i32_1 = arith.constant 0 : i32
    return %c0_i32, %c0_i32_0 : i32, i32
  }
  func.func @transform_5(%arg0: i32) -> (i32, i32) {
    %c0_i32 = arith.constant 0 : i32
    %c0_i32_0 = arith.constant 0 : i32
    %c0_i32_1 = arith.constant 0 : i32
    return %c0_i32, %c0_i32_0 : i32, i32
  }
  func.func @transform_6(%arg0: i32) -> (i32, i32) {
    %c0_i32 = arith.constant 0 : i32
    %c0_i32_0 = arith.constant 0 : i32
    %c0_i32_1 = arith.constant 0 : i32
    return %c0_i32, %c0_i32_0 : i32, i32
  }
  func.func @transform_7(%arg0: i32) -> (i32, i32) {
    %c0_i32 = arith.constant 0 : i32
    %c0_i32_0 = arith.constant 0 : i32
    %c0_i32_1 = arith.constant 0 : i32
    return %c0_i32, %c0_i32_0 : i32, i32
  }
  func.func @transform_8(%arg0: i32) -> (i32, i32) {
    %c0_i32 = arith.constant 0 : i32
    %c0_i32_0 = arith.constant 0 : i32
    %c0_i32_1 = arith.constant 0 : i32
    return %c0_i32, %c0_i32_0 : i32, i32
  }
  func.func @transform_9(%arg0: i32) -> (i32, i32) {
    %c0_i32 = arith.constant 0 : i32
    %c0_i32_0 = arith.constant 0 : i32
    %c0_i32_1 = arith.constant 0 : i32
    return %c0_i32, %c0_i32_0 : i32, i32
  }
  func.func @transform_10(%arg0: i32) -> (i32, i32) {
    %c0_i32 = arith.constant 0 : i32
    %c0_i32_0 = arith.constant 0 : i32
    %c0_i32_1 = arith.constant 0 : i32
    return %c0_i32, %c0_i32_0 : i32, i32
  }
}

</mosaic_0001>

<llo_original>
// kernel: tpu_custom_call.1
$region0: #{tpu_custom_call.1}
  #allocation0 [shape = 'u32[]', space=smem, size = 0x4, offset = 0x4, fixed_abs, tag = 'smem constant byte address 0x4 - core index']
  #allocation1 [shape = 'u32[144,128]{1,0:T(1,128)}', space=vmem, size = 0x12000, scoped, tag = 'internal scratch']
  #allocation2 [shape = 'f32[10,64]{1,0:T(8,128)}', space=vmem, size = 0x2000, scoped, tag = 'scratch operand']
  #allocation3 [shape = 'f32[8,64]{1,0:T(8,128)}', space=vmem, size = 0x1000, scoped, tag = 'scratch operand']
  %s0 = inlined_call_operand.vmem [shape: bf16[10,3072], index: 0, kind: input, shape index: {}]
  %s1 = inlined_call_operand.vmem [shape: bf16[8,3072], index: 1, kind: input, shape index: {}]
  %s2 = inlined_call_operand.vmem [shape: bf16[3072,64], index: 2, kind: input, shape index: {}]
  %s3 = inlined_call_operand.vmem [shape: f32[1,64], index: 3, kind: input, shape index: {}]
  %s4 = inlined_call_operand.vmem [shape: f32[5,10], index: 4, kind: input, shape index: {}]
  %s5 = inlined_call_operand.hbm [shape: f32[10,64], index: 5, kind: output, shape index: {0}]
  %s6 = inlined_call_operand.hbm [shape: f32[5,64], index: 6, kind: output, shape index: {1}]
  %s7 = inlined_call_operand.hbm [shape: f32[1,5], index: 7, kind: output, shape index: {2}]
  %s8 = inlined_call_operand.hbm [shape: f32[8,64], index: 8, kind: output, shape index: {3}]
  %s9 = inlined_call_operand.hbm [shape: f32[8,5], index: 9, kind: output, shape index: {4}]
  %s10 = inlined_call_operand.hbm [shape: f32[8,5], index: 10, kind: output, shape index: {5}]
  %11 = xla_tuple %s5, %s6, %s7, %s8, %s9, %s10
  %s12 = sld [smem:[#allocation0]]
  $region124: #{tpu_custom_call.1} parent=0
    _
  %s14 = ssub.s32 1, %s12
  %s15 = scalar_select 0, %s14, %s12
  $region1: #{tpu_custom_call.1} parent=0
    #allocation4 [shape = 'u8[65536]{0}', space=vmem, size = 0x10000, scoped, tag = 'input window, operand 0']
    #allocation5 [shape = 'u8[8192]{0}', space=vmem, size = 0x2000, scoped, tag = 'output window, operand 0, single buffered']
    #allocation6 [shape = 's32[2]{0}', space=sflag, size = 0x8, scoped, tag = 'scoped memory for tpu_custom_call.1']
    #allocation7 [shape = 'u8[4096]{0}', space=vmem, size = 0x1000, scoped, tag = 'output window, operand 1, single buffered']
    #allocation8 [shape = 's32[1]{0}', space=sflag, size = 0x4, scoped, tag = 'scoped memory for tpu_custom_call.1']
    #allocation9 [shape = 'u8[512]{0}', space=vmem, size = 0x400, scoped, tag = 'output window, operand 2, single buffered']
    #allocation10 [shape = 'u8[4096]{0}', space=vmem, size = 0x1000, scoped, tag = 'output window, operand 3, single buffered']
    #allocation11 [shape = 's32[1]{0}', space=sflag, size = 0x4, scoped, tag = 'scoped memory for tpu_custom_call.1']
    #allocation12 [shape = 'u8[4096]{0}', space=vmem, size = 0x1000, scoped, tag = 'output window, operand 4, single buffered']
    #allocation13 [shape = 'u8[4096]{0}', space=vmem, size = 0x1000, scoped, tag = 'output window, operand 5, single buffered']
    #allocation14 [shape = 's32[1]{0}', space=sflag, size = 0x4, scoped, tag = 'scoped memory for tpu_custom_call.1']
    %16 = vsyncpa [#allocation6], 0
    %17 = vsyncpa [#allocation8], 0
    %18 = vsyncpa [#allocation11], 0
    %19 = vsyncpa [#allocation14], 0
    loop: start=0, step=1, limit=5
    $region2: #{tpu_custom_call.1} parent=1 // loop_pre_header
      _
    $region3: #{tpu_custom_call.1} parent=1 // loop_header
      %s21 = sphi 0, %s25
      %p22 = scmp.ge.s32.totalorder %s21, 5
      %s31 = sphi 0, %s33
      %s34 = sphi 0, %s31
      %s35 = sphi 0, %s34
      %s51 = sphi 0, %s35
      %s57 = sphi 0, %s59
      %s60 = sphi 0, %s57
      %s61 = sphi 0, %s60
      %s77 = sphi 0, %s61
      %s83 = sphi 0, %s85
      %s86 = sphi 0, %s83
      %s87 = sphi 0, %s86
      %s103 = sphi 0, %s87
      %s107 = sphi 0, %s107
      %s109 = sphi 0, %s107
      %s110 = sphi 0, %s109
      %s124 = sphi 0, %s110
      %s128 = sphi 0, %s128
      %s130 = sphi 0, %s128
      %s131 = sphi 0, %s130
      %s145 = sphi 0, %s131
      %s149 = sphi 0, %s149
      %s151 = sphi 0, %s149
      %s152 = sphi 0, %s151
      %s166 = sphi 0, %s152
      %s170 = sphi 0, %s170
      %s172 = sphi 0, %s170
      %s173 = sphi 0, %s172
      %s187 = sphi 0, %s173
      %s191 = sphi 0, %s191
      %s193 = sphi 0, %s191
      %s194 = sphi 0, %s193
      %s208 = sphi 0, %s194
      %s212 = sphi 0, %s212
      %s214 = sphi 0, %s212
      %s215 = sphi 0, %s214
      %s229 = sphi 0, %s215
      %s233 = sphi 0, %s233
      %s235 = sphi 0, %s233
      %s236 = sphi 0, %s235
      %s250 = sphi 0, %s236
      %s254 = sphi 0, %s254
      %s256 = sphi 0, %s254
      %s257 = sphi 0, %s256
      %s271 = sphi 0, %s257
    $region4: #{tpu_custom_call.1} parent=1 // loop_header_branch
      %24 = sbr.rel (%p22) target = $region8
    $region5: #{tpu_custom_call.1} parent=1 // loop_body
      %s26 = ssub.s32 %s21, 1
      %s27 = ssub.s32 %s21, 2
      %s28 = sadd.s32 %s21, 1
      %s29 = ssub.s32 %s21, %s28
      %p30 = scmp.eq.s32.totalorder %s29, 0
      %s32 = sadd.s32 %s31, 1
      %s33 = scalar_select %p30, %s31, %s32
      %p36 = pneg %p30
      %p37 = scmp.eq.s32.totalorder %s21, 2
      %p38 = por %p36, %p37
      %p39 = scmp.ne.s32.totalorder %s31, %s34
      %p40 = scmp.eq.s32.totalorder %s21, 0
      %p41 = por %p39, %p40
      %p42 = scmp.ne.s32.totalorder %s31, %s34
      %p43 = scmp.eq.s32.totalorder %s26, 2
      %p44 = por %p42, %p43
      %p45 = scmp.ne.s32.totalorder %s34, %s35
      %p46 = scmp.eq.s32.totalorder %s26, 0
      %p47 = por %p45, %p46
      %p48 = scmp.ne.s32.totalorder %s34, %s35
      %p49 = scmp.eq.s32.totalorder %s27, 2
      %p50 = por %p48, %p49
      %p52 = scmp.ne.s32.totalorder %s35, %s51
      %p53 = scmp.eq.s32.totalorder %s27, 0
      %p54 = por %p52, %p53
      %s55 = ssub.s32 %s21, %s28
      %p56 = scmp.eq.s32.totalorder %s55, 0
      %s58 = sadd.s32 %s57, 1
      %s59 = scalar_select %p56, %s57, %s58
      %p62 = pneg %p56
      %p63 = scmp.eq.s32.totalorder %s21, 2
      %p64 = por %p62, %p63
      %p65 = scmp.ne.s32.totalorder %s57, %s60
      %p66 = scmp.eq.s32.totalorder %s21, 0
      %p67 = por %p65, %p66
      %p68 = scmp.ne.s32.totalorder %s57, %s60
      %p69 = scmp.eq.s32.totalorder %s26, 2
      %p70 = por %p68, %p69
      %p71 = scmp.ne.s32.totalorder %s60, %s61
      %p72 = scmp.eq.s32.totalorder %s26, 0
      %p73 = por %p71, %p72
      %p74 = scmp.ne.s32.totalorder %s60, %s61
      %p75 = scmp.eq.s32.totalorder %s27, 2
      %p76 = por %p74, %p75
      %p78 = scmp.ne.s32.totalorder %s61, %s77
      %p79 = scmp.eq.s32.totalorder %s27, 0
      %p80 = por %p78, %p79
      %s81 = ssub.s32 %s21, %s28
      %p82 = scmp.eq.s32.totalorder %s81, 0
      %s84 = sadd.s32 %s83, 1
      %s85 = scalar_select %p82, %s83, %s84
      %p88 = pneg %p82
      %p89 = scmp.eq.s32.totalorder %s21, 2
      %p90 = por %p88, %p89
      %p91 = scmp.ne.s32.totalorder %s83, %s86
      %p92 = scmp.eq.s32.totalorder %s21, 0
      %p93 = por %p91, %p92
      %p94 = scmp.ne.s32.totalorder %s83, %s86
      %p95 = scmp.eq.s32.totalorder %s26, 2
      %p96 = por %p94, %p95
      %p97 = scmp.ne.s32.totalorder %s86, %s87
      %p98 = scmp.eq.s32.totalorder %s26, 0
      %p99 = por %p97, %p98
      %p100 = scmp.ne.s32.totalorder %s86, %s87
      %p101 = scmp.eq.s32.totalorder %s27, 2
      %p102 = por %p100, %p101
      %p104 = scmp.ne.s32.totalorder %s87, %s103
      %p105 = scmp.eq.s32.totalorder %s27, 0
      %p106 = por %p104, %p105
      %s108 = sadd.s32 %s107, 1
      %p111 = scmp.eq.s32.totalorder %s21, 2
      %p112 = scmp.ne.s32.totalorder %s107, %s109
      %p113 = scmp.eq.s32.totalorder %s21, 0
      %p114 = por %p112, %p113
      %p115 = scmp.ne.s32.totalorder %s107, %s109
      %p116 = scmp.eq.s32.totalorder %s26, 2
      %p117 = por %p115, %p116
      %p118 = scmp.ne.s32.totalorder %s109, %s110
      %p119 = scmp.eq.s32.totalorder %s26, 0
      %p120 = por %p118, %p119
      %p121 = scmp.ne.s32.totalorder %s109, %s110
      %p122 = scmp.eq.s32.totalorder %s27, 2
      %p123 = por %p121, %p122
      %p125 = scmp.ne.s32.totalorder %s110, %s124
      %p126 = scmp.eq.s32.totalorder %s27, 0
      %p127 = por %p125, %p126
      %s129 = sadd.s32 %s128, 1
      %p132 = scmp.eq.s32.totalorder %s21, 2
      %p133 = scmp.ne.s32.totalorder %s128, %s130
      %p134 = scmp.eq.s32.totalorder %s21, 0
      %p135 = por %p133, %p134
      %p136 = scmp.ne.s32.totalorder %s128, %s130
      %p137 = scmp.eq.s32.totalorder %s26, 2
      %p138 = por %p136, %p137
      %p139 = scmp.ne.s32.totalorder %s130, %s131
      %p140 = scmp.eq.s32.totalorder %s26, 0
      %p141 = por %p139, %p140
      %p142 = scmp.ne.s32.totalorder %s130, %s131
      %p143 = scmp.eq.s32.totalorder %s27, 2
      %p144 = por %p142, %p143
      %p146 = scmp.ne.s32.totalorder %s131, %s145
      %p147 = scmp.eq.s32.totalorder %s27, 0
      %p148 = por %p146, %p147
      %s150 = sadd.s32 %s149, 1
      %p153 = scmp.eq.s32.totalorder %s21, 2
      %p154 = scmp.ne.s32.totalorder %s149, %s151
      %p155 = scmp.eq.s32.totalorder %s21, 0
      %p156 = por %p154, %p155
      %p157 = scmp.ne.s32.totalorder %s149, %s151
      %p158 = scmp.eq.s32.totalorder %s26, 2
      %p159 = por %p157, %p158
      %p160 = scmp.ne.s32.totalorder %s151, %s152
      %p161 = scmp.eq.s32.totalorder %s26, 0
      %p162 = por %p160, %p161
      %p163 = scmp.ne.s32.totalorder %s151, %s152
      %p164 = scmp.eq.s32.totalorder %s27, 2
      %p165 = por %p163, %p164
      %p167 = scmp.ne.s32.totalorder %s152, %s166
      %p168 = scmp.eq.s32.totalorder %s27, 0
      %p169 = por %p167, %p168
      %s171 = sadd.s32 %s170, 1
      %p174 = scmp.eq.s32.totalorder %s21, 2
      %p175 = scmp.ne.s32.totalorder %s170, %s172
      %p176 = scmp.eq.s32.totalorder %s21, 0
      %p177 = por %p175, %p176
      %p178 = scmp.ne.s32.totalorder %s170, %s172
      %p179 = scmp.eq.s32.totalorder %s26, 2
      %p180 = por %p178, %p179
      %p181 = scmp.ne.s32.totalorder %s172, %s173
      %p182 = scmp.eq.s32.totalorder %s26, 0
      %p183 = por %p181, %p182
      %p184 = scmp.ne.s32.totalorder %s172, %s173
      %p185 = scmp.eq.s32.totalorder %s27, 2
      %p186 = por %p184, %p185
      %p188 = scmp.ne.s32.totalorder %s173, %s187
      %p189 = scmp.eq.s32.totalorder %s27, 0
      %p190 = por %p188, %p189
      %s192 = sadd.s32 %s191, 1
      %p195 = scmp.eq.s32.totalorder %s21, 2
      %p196 = scmp.ne.s32.totalorder %s191, %s193
      %p197 = scmp.eq.s32.totalorder %s21, 0
      %p198 = por %p196, %p197
      %p199 = scmp.ne.s32.totalorder %s191, %s193
      %p200 = scmp.eq.s32.totalorder %s26, 2
      %p201 = por %p199, %p200
      %p202 = scmp.ne.s32.totalorder %s193, %s194
      %p203 = scmp.eq.s32.totalorder %s26, 0
      %p204 = por %p202, %p203
      %p205 = scmp.ne.s32.totalorder %s193, %s194
      %p206 = scmp.eq.s32.totalorder %s27, 2
      %p207 = por %p205, %p206
      %p209 = scmp.ne.s32.totalorder %s194, %s208
      %p210 = scmp.eq.s32.totalorder %s27, 0
      %p211 = por %p209, %p210
      %s213 = sadd.s32 %s212, 1
      %p216 = scmp.eq.s32.totalorder %s21, 2
      %p217 = scmp.ne.s32.totalorder %s212, %s214
      %p218 = scmp.eq.s32.totalorder %s21, 0
      %p219 = por %p217, %p218
      %p220 = scmp.ne.s32.totalorder %s212, %s214
      %p221 = scmp.eq.s32.totalorder %s26, 2
      %p222 = por %p220, %p221
      %p223 = scmp.ne.s32.totalorder %s214, %s215
      %p224 = scmp.eq.s32.totalorder %s26, 0
      %p225 = por %p223, %p224
      %p226 = scmp.ne.s32.totalorder %s214, %s215
      %p227 = scmp.eq.s32.totalorder %s27, 2
      %p228 = por %p226, %p227
      %p230 = scmp.ne.s32.totalorder %s215, %s229
      %p231 = scmp.eq.s32.totalorder %s27, 0
      %p232 = por %p230, %p231
      %s234 = sadd.s32 %s233, 1
      %p237 = scmp.eq.s32.totalorder %s21, 2
      %p238 = scmp.ne.s32.totalorder %s233, %s235
      %p239 = scmp.eq.s32.totalorder %s21, 0
      %p240 = por %p238, %p239
      %p241 = scmp.ne.s32.totalorder %s233, %s235
      %p242 = scmp.eq.s32.totalorder %s26, 2
      %p243 = por %p241, %p242
      %p244 = scmp.ne.s32.totalorder %s235, %s236
      %p245 = scmp.eq.s32.totalorder %s26, 0
      %p246 = por %p244, %p245
      %p247 = scmp.ne.s32.totalorder %s235, %s236
      %p248 = scmp.eq.s32.totalorder %s27, 2
      %p249 = por %p247, %p248
      %p251 = scmp.ne.s32.totalorder %s236, %s250
      %p252 = scmp.eq.s32.totalorder %s27, 0
      %p253 = por %p251, %p252
      %s255 = sadd.s32 %s254, 1
      %p258 = scmp.eq.s32.totalorder %s21, 2
      %p259 = scmp.ne.s32.totalorder %s254, %s256
      %p260 = scmp.eq.s32.totalorder %s21, 0
      %p261 = por %p259, %p260
      %p262 = scmp.ne.s32.totalorder %s254, %s256
      %p263 = scmp.eq.s32.totalorder %s26, 2
      %p264 = por %p262, %p263
      %p265 = scmp.ne.s32.totalorder %s256, %s257
      %p266 = scmp.eq.s32.totalorder %s26, 0
      %p267 = por %p265, %p266
      %p268 = scmp.ne.s32.totalorder %s256, %s257
      %p269 = scmp.eq.s32.totalorder %s27, 2
      %p270 = por %p268, %p269
      %p272 = scmp.ne.s32.totalorder %s257, %s271
      %p273 = scmp.eq.s32.totalorder %s27, 0
      %p274 = por %p272, %p273
      %p275 = scmp.le.s32.totalorder 1, %s21
      %p276 = scmp.lt.s32.totalorder %s21, 4
      %p277 = pnand %p275, %p276
      %p278 = pneg %p277
      // Predicated region
      $region9: #{tpu_custom_call.1} parent=5 // pred_check
        _
      $region10: #{tpu_custom_call.1} parent=5 // pred_check_branch
        %280 = sbr.rel (%p277) target = $region12
      $region11: #{tpu_custom_call.1} parent=5 // pred_region
        %s281 = ssub.s32 %s21, 1
        // Predicated region
        $region13: #{tpu_custom_call.1} parent=11 // pred_check
          %p282 = pneg %p120
        $region14: #{tpu_custom_call.1} parent=11 // pred_check_branch
          %284 = sbr.rel (%p282) target = $region16
        $region15: #{tpu_custom_call.1} parent=11 // pred_region
          _
        $region16: #{tpu_custom_call.1} parent=11 // pred_fallthru
          _
        // Predicated region
        $region17: #{tpu_custom_call.1} parent=11 // pred_check
          %p285 = pneg %p141
        $region18: #{tpu_custom_call.1} parent=11 // pred_check_branch
          %287 = sbr.rel (%p285) target = $region20
        $region19: #{tpu_custom_call.1} parent=11 // pred_region
          _
        $region20: #{tpu_custom_call.1} parent=11 // pred_fallthru
          _
      $region12: #{tpu_custom_call.1} parent=5 // pred_fallthru
        _
      %p288 = scmp.lt.s32.totalorder %s21, 3
      // Predicated region
      $region21: #{tpu_custom_call.1} parent=5 // pred_check
        %p289 = pneg %p288
      $region22: #{tpu_custom_call.1} parent=5 // pred_check_branch
        %291 = sbr.rel (%p289) target = $region24
      $region23: #{tpu_custom_call.1} parent=5 // pred_region
        // Predicated region
        $region25: #{tpu_custom_call.1} parent=23 // pred_check
          %p292 = pneg %p41
        $region26: #{tpu_custom_call.1} parent=23 // pred_check_branch
          %294 = sbr.rel (%p292) target = $region28
        $region27: #{tpu_custom_call.1} parent=23 // pred_region
          %s295 = sand.u32 %s31, 1
          %s296 = sand.u32 %s31, 1
          %s297 = smul.addr %s296, 64
          %s298 = scalar_lea.vmem [#allocation4], %s297
          %s299 = smul.u32 8, %s21
          %s300 = smul.addr %s299, 4
          %s301 = scalar_lea.vmem %s0, %s300
          // Predicated region
          $region29: #{tpu_custom_call.1} parent=27 // pred_check
            _
          $region30: #{tpu_custom_call.1} parent=27 // pred_check_branch
            %303 = sbr.rel (0) target = $region32
          $region31: #{tpu_custom_call.1} parent=27 // pred_region
            // Predicated region
            $region33: #{tpu_custom_call.1} parent=31 // pred_check
              _
            $region34: #{tpu_custom_call.1} parent=31 // pred_check_branch
              %305 = sbr.rel (0) target = $region36
            $region35: #{tpu_custom_call.1} parent=31 // pred_region
              loop: start=0, step=1, limit=1
              $region37: #{tpu_custom_call.1} parent=35 // loop_pre_header
                _
              $region38: #{tpu_custom_call.1} parent=35 // loop_header
                %s307 = sphi 0, %s311
                %p308 = scmp.ge.s32.totalorder %s307, 1
                %s312 = sphi %s301, %s301
                %s313 = sphi %s298, %s298
              $region39: #{tpu_custom_call.1} parent=35 // loop_header_branch
                %310 = sbr.rel (%p308) target = $region43
              $region40: #{tpu_custom_call.1} parent=35 // loop_body
                %v314 = vld [vmem:[%s312] sm:$0xff]
                %315 = vst [vmem:[%s313] sm:$0xff] %v314
                %v316 = vld [vmem:[%s312 + $0x8] sm:$0xff]
                %317 = vst [vmem:[%s313 + $0x8] sm:$0xff] %v316
                %v318 = vld [vmem:[%s312 + $0x10] sm:$0xff]
                %319 = vst [vmem:[%s313 + $0x10] sm:$0xff] %v318
                %v320 = vld [vmem:[%s312 + $0x18] sm:$0xff]
                %321 = vst [vmem:[%s313 + $0x18] sm:$0xff] %v320
                %v322 = vld [vmem:[%s312 + $0x60] sm:$0xff]
                %323 = vst [vmem:[%s313 + $0x20] sm:$0xff] %v322
                %v324 = vld [vmem:[%s312 + $0x68] sm:$0xff]
                %325 = vst [vmem:[%s313 + $0x28] sm:$0xff] %v324
                %v326 = vld [vmem:[%s312 + $0x70] sm:$0xff]
                %327 = vst [vmem:[%s313 + $0x30] sm:$0xff] %v326
                %v328 = vld [vmem:[%s312 + $0x78] sm:$0xff]
                %329 = vst [vmem:[%s313 + $0x38] sm:$0xff] %v328
              $region41: #{tpu_custom_call.1} parent=35 // loop_footer
                %s311 = sadd.s32 1, %s307
              $region42: #{tpu_custom_call.1} parent=35 // loop_footer_branch
                %306 = sbr.rel target = $region38
              $region43: #{tpu_custom_call.1} parent=35 // loop_exit
                _
            $region36: #{tpu_custom_call.1} parent=31 // pred_fallthru
              _
            // Predicated region
            $region44: #{tpu_custom_call.1} parent=31 // pred_check
              _
            $region45: #{tpu_custom_call.1} parent=31 // pred_check_branch
              %331 = sbr.rel target = $region47
            $region46: #{tpu_custom_call.1} parent=31 // pred_region
              _
            $region47: #{tpu_custom_call.1} parent=31 // pred_fallthru
              _
          $region32: #{tpu_custom_call.1} parent=27 // pred_fallthru
            _
          %332 = vnop
        $region28: #{tpu_custom_call.1} parent=23 // pred_fallthru
          _
        // Predicated region
        $region48: #{tpu_custom_call.1} parent=23 // pred_check
          %p333 = pneg %p67
        $region49: #{tpu_custom_call.1} parent=23 // pred_check_branch
          %335 = sbr.rel (%p333) target = $region51
        $region50: #{tpu_custom_call.1} parent=23 // pred_region
          %s336 = smul.u32 8, %s21
          %p337 = scmp.lt.s32.totalorder %s336, 23
          %s338 = scalar_select %p337, %s336, 23
          %s339 = smul.addr %s338, 4
          %s340 = scalar_lea.vmem %s1, %s339
          %s341 = smul.u32 8, %s21
        $region51: #{tpu_custom_call.1} parent=23 // pred_fallthru
          _
        // Predicated region
        $region52: #{tpu_custom_call.1} parent=23 // pred_check
          %p342 = pneg %p93
        $region53: #{tpu_custom_call.1} parent=23 // pred_check_branch
          %344 = sbr.rel (%p342) target = $region55
        $region54: #{tpu_custom_call.1} parent=23 // pred_region
          %s345 = smul.u32 128, %s21
          %p346 = scmp.lt.s32.totalorder %s345, 383
          %s347 = scalar_select %p346, %s345, 383
          %s348 = smul.addr %s347, 4
          %s349 = scalar_lea.vmem %s2, %s348
          %s350 = smul.u32 128, %s21
        $region55: #{tpu_custom_call.1} parent=23 // pred_fallthru
          _
      $region24: #{tpu_custom_call.1} parent=5 // pred_fallthru
        _
      %p351 = scmp.le.s32.totalorder 1, %s21
      %p352 = scmp.lt.s32.totalorder %s21, 4
      %p353 = pnand %p351, %p352
      %p354 = pneg %p353
      // Predicated region
      $region56: #{tpu_custom_call.1} parent=5 // pred_check
        _
      $region57: #{tpu_custom_call.1} parent=5 // pred_check_branch
        %356 = sbr.rel (%p353) target = $region59
      $region58: #{tpu_custom_call.1} parent=5 // pred_region
        %s357 = ssub.s32 %s21, 1
        %s358 = sand.u32 %s34, 1
        %s359 = sand.u32 %s34, 1
        %s360 = smul.addr %s359, 64
        %s361 = scalar_lea.vmem [#allocation4], %s360
        // Predicated region
        $region60: #{tpu_custom_call.1} parent=58 // pred_check
          %p362 = pneg %p47
        $region61: #{tpu_custom_call.1} parent=58 // pred_check_branch
          %364 = sbr.rel (%p362) target = $region63
        $region62: #{tpu_custom_call.1} parent=58 // pred_region
          _
        $region63: #{tpu_custom_call.1} parent=58 // pred_fallthru
          _
        %s365 = sand.u32 %s34, 1
        %s366 = sand.u32 %s34, 1
        %s367 = smul.addr %s366, 64
        %s368 = scalar_lea.vmem [#allocation4], %s367
        %p369 = pneg %p47
        %p370 = pneg %p44
        %s371 = smul.u32 8, %s26
        %p372 = scmp.lt.s32.totalorder %s371, 23
        %s373 = scalar_select %p372, %s371, 23
        %s374 = smul.addr %s373, 4
        %s375 = scalar_lea.vmem %s1, %s374
        %p376 = pneg %p73
        %p377 = pneg %p70
        %s378 = smul.u32 128, %s26
        %p379 = scmp.lt.s32.totalorder %s378, 383
        %s380 = scalar_select %p379, %s378, 383
        %s381 = smul.addr %s380, 4
        %s382 = scalar_lea.vmem %s2, %s381
        %p383 = pneg %p99
        %p384 = pneg %p96
        %p385 = pneg %p120
        %p386 = pneg %p117
        %p387 = pneg %p141
        %p388 = pneg %p138
        %p389 = pneg %p162
        %p390 = pneg %p159
        %p391 = pneg %p183
        %p392 = pneg %p180
        %p393 = pneg %p204
        %p394 = pneg %p201
        %p395 = pneg %p225
        %p396 = pneg %p222
        %p397 = pneg %p246
        %p398 = pneg %p243
        %p399 = pneg %p267
        %p400 = pneg %p264
        %s401 = smul.u32 8, %s26
        %s402 = smul.u32 8, %s26
        %p403 = scmp.lt.s32.totalorder %s402, 23
        %s404 = scalar_select %p403, %s402, 23
        %s405 = smul.addr %s404, 4
        %s406 = scalar_lea.vmem %s1, %s405
        %s407 = smul.u32 8, %s26
        %s408 = smul.u32 128, %s26
        %p409 = scmp.lt.s32.totalorder %s408, 383
        %s410 = scalar_select %p409, %s408, 383
        %s411 = smul.addr %s410, 4
        %s412 = scalar_lea.vmem %s2, %s411
        %s413 = smul.u32 128, %s26
        %p415 = scmp.eq.s32.totalorder %s26, 0
        // Predicated region
        $region64: #{tpu_custom_call.1} parent=58 // pred_check
          %p416 = pneg %p415
        $region65: #{tpu_custom_call.1} parent=58 // pred_check_branch
          %418 = sbr.rel (%p416) target = $region67
        $region66: #{tpu_custom_call.1} parent=58 // pred_region
          %vm419 = vcmask 523264
          %420 = vst.msk [vmem:[#allocation2] sm:$0xff] %vm419, 0.0
          %vm421 = vcmask 517120
          %422 = vst.msk [vmem:[#allocation2 + $0x8] sm:$0x3] %vm421, 0.0
          %423 = vst.msk [vmem:[#allocation3] sm:$0xff] %vm419, 0.0
        $region67: #{tpu_custom_call.1} parent=58 // pred_fallthru
          _
        %v424 = vld [vmem:[%s412] sm:$0xf]
        %v425 = vld [vmem:[%s412 + $0x4] sm:$0xf]
        %v426 = vld [vmem:[%s412 + $0x8] sm:$0xf]
        %v427 = vld [vmem:[%s412 + $0xc] sm:$0xf]
        %v428 = vld [vmem:[%s412 + $0x10] sm:$0xf]
        %v429 = vld [vmem:[%s412 + $0x14] sm:$0xf]
        %v430 = vld [vmem:[%s412 + $0x18] sm:$0xf]
        %v431 = vld [vmem:[%s412 + $0x1c] sm:$0xf]
        %v432 = vld [vmem:[%s412 + $0x20] sm:$0xf]
        %v433 = vld [vmem:[%s412 + $0x24] sm:$0xf]
        %v434 = vld [vmem:[%s412 + $0x28] sm:$0xf]
        %v435 = vld [vmem:[%s412 + $0x2c] sm:$0xf]
        %v436 = vld [vmem:[%s412 + $0x30] sm:$0xf]
        %v437 = vld [vmem:[%s412 + $0x34] sm:$0xf]
        %v438 = vld [vmem:[%s412 + $0x38] sm:$0xf]
        %v439 = vld [vmem:[%s412 + $0x3c] sm:$0xf]
        %v440 = vld [vmem:[%s412 + $0x40] sm:$0xf]
        %v441 = vld [vmem:[%s412 + $0x44] sm:$0xf]
        %v442 = vld [vmem:[%s412 + $0x48] sm:$0xf]
        %v443 = vld [vmem:[%s412 + $0x4c] sm:$0xf]
        %v444 = vld [vmem:[%s412 + $0x50] sm:$0xf]
        %v445 = vld [vmem:[%s412 + $0x54] sm:$0xf]
        %v446 = vld [vmem:[%s412 + $0x58] sm:$0xf]
        %v447 = vld [vmem:[%s412 + $0x5c] sm:$0xf]
        %v448 = vld [vmem:[%s412 + $0x60] sm:$0xf]
        %v449 = vld [vmem:[%s412 + $0x64] sm:$0xf]
        %v450 = vld [vmem:[%s412 + $0x68] sm:$0xf]
        %v451 = vld [vmem:[%s412 + $0x6c] sm:$0xf]
        %v452 = vld [vmem:[%s412 + $0x70] sm:$0xf]
        %v453 = vld [vmem:[%s412 + $0x74] sm:$0xf]
        %v454 = vld [vmem:[%s412 + $0x78] sm:$0xf]
        %v455 = vld [vmem:[%s412 + $0x7c] sm:$0xf]
        %v456 = vld [vmem:[%s412 + $0x80] sm:$0xf]
        %v457 = vld [vmem:[%s412 + $0x84] sm:$0xf]
        %v458 = vld [vmem:[%s412 + $0x88] sm:$0xf]
        %v459 = vld [vmem:[%s412 + $0x8c] sm:$0xf]
        %v460 = vld [vmem:[%s412 + $0x90] sm:$0xf]
        %v461 = vld [vmem:[%s412 + $0x94] sm:$0xf]
        %v462 = vld [vmem:[%s412 + $0x98] sm:$0xf]
        %v463 = vld [vmem:[%s412 + $0x9c] sm:$0xf]
        %v464 = vld [vmem:[%s412 + $0xa0] sm:$0xf]
        %v465 = vld [vmem:[%s412 + $0xa4] sm:$0xf]
        %v466 = vld [vmem:[%s412 + $0xa8] sm:$0xf]
        %v467 = vld [vmem:[%s412 + $0xac] sm:$0xf]
        %v468 = vld [vmem:[%s412 + $0xb0] sm:$0xf]
        %v469 = vld [vmem:[%s412 + $0xb4] sm:$0xf]
        %v470 = vld [vmem:[%s412 + $0xb8] sm:$0xf]
        %v471 = vld [vmem:[%s412 + $0xbc] sm:$0xf]
        %v472 = vld [vmem:[%s412 + $0xc0] sm:$0xf]
        %v473 = vld [vmem:[%s412 + $0xc4] sm:$0xf]
        %v474 = vld [vmem:[%s412 + $0xc8] sm:$0xf]
        %v475 = vld [vmem:[%s412 + $0xcc] sm:$0xf]
        %v476 = vld [vmem:[%s412 + $0xd0] sm:$0xf]
        %v477 = vld [vmem:[%s412 + $0xd4] sm:$0xf]
        %v478 = vld [vmem:[%s412 + $0xd8] sm:$0xf]
        %v479 = vld [vmem:[%s412 + $0xdc] sm:$0xf]
        %v480 = vld [vmem:[%s412 + $0xe0] sm:$0xf]
        %v481 = vld [vmem:[%s412 + $0xe4] sm:$0xf]
        %v482 = vld [vmem:[%s412 + $0xe8] sm:$0xf]
        %v483 = vld [vmem:[%s412 + $0xec] sm:$0xf]
        %v484 = vld [vmem:[%s412 + $0xf0] sm:$0xf]
        %v485 = vld [vmem:[%s412 + $0xf4] sm:$0xf]
        %v486 = vld [vmem:[%s412 + $0xf8] sm:$0xf]
        %v487 = vld [vmem:[%s412 + $0xfc] sm:$0xf]
        %v488 = vld [vmem:[%s412 + $0x100] sm:$0xf]
        %v489 = vld [vmem:[%s412 + $0x104] sm:$0xf]
        %v490 = vld [vmem:[%s412 + $0x108] sm:$0xf]
        %v491 = vld [vmem:[%s412 + $0x10c] sm:$0xf]
        %v492 = vld [vmem:[%s412 + $0x110] sm:$0xf]
        %v493 = vld [vmem:[%s412 + $0x114] sm:$0xf]
        %v494 = vld [vmem:[%s412 + $0x118] sm:$0xf]
        %v495 = vld [vmem:[%s412 + $0x11c] sm:$0xf]
        %v496 = vld [vmem:[%s412 + $0x120] sm:$0xf]
        %v497 = vld [vmem:[%s412 + $0x124] sm:$0xf]
        %v498 = vld [vmem:[%s412 + $0x128] sm:$0xf]
        %v499 = vld [vmem:[%s412 + $0x12c] sm:$0xf]
        %v500 = vld [vmem:[%s412 + $0x130] sm:$0xf]
        %v501 = vld [vmem:[%s412 + $0x134] sm:$0xf]
        %v502 = vld [vmem:[%s412 + $0x138] sm:$0xf]
        %v503 = vld [vmem:[%s412 + $0x13c] sm:$0xf]
        %v504 = vld [vmem:[%s412 + $0x140] sm:$0xf]
        %v505 = vld [vmem:[%s412 + $0x144] sm:$0xf]
        %v506 = vld [vmem:[%s412 + $0x148] sm:$0xf]
        %v507 = vld [vmem:[%s412 + $0x14c] sm:$0xf]
        %v508 = vld [vmem:[%s412 + $0x150] sm:$0xf]
        %v509 = vld [vmem:[%s412 + $0x154] sm:$0xf]
        %v510 = vld [vmem:[%s412 + $0x158] sm:$0xf]
        %v511 = vld [vmem:[%s412 + $0x15c] sm:$0xf]
        %v512 = vld [vmem:[%s412 + $0x160] sm:$0xf]
        %v513 = vld [vmem:[%s412 + $0x164] sm:$0xf]
        %v514 = vld [vmem:[%s412 + $0x168] sm:$0xf]
        %v515 = vld [vmem:[%s412 + $0x16c] sm:$0xf]
        %v516 = vld [vmem:[%s412 + $0x170] sm:$0xf]
        %v517 = vld [vmem:[%s412 + $0x174] sm:$0xf]
        %v518 = vld [vmem:[%s412 + $0x178] sm:$0xf]
        %v519 = vld [vmem:[%s412 + $0x17c] sm:$0xf]
        %v520 = vld [vmem:[%s412 + $0x180] sm:$0xf]
        %v521 = vld [vmem:[%s412 + $0x184] sm:$0xf]
        %v522 = vld [vmem:[%s412 + $0x188] sm:$0xf]
        %v523 = vld [vmem:[%s412 + $0x18c] sm:$0xf]
        %v524 = vld [vmem:[%s412 + $0x190] sm:$0xf]
        %v525 = vld [vmem:[%s412 + $0x194] sm:$0xf]
        %v526 = vld [vmem:[%s412 + $0x198] sm:$0xf]
        %v527 = vld [vmem:[%s412 + $0x19c] sm:$0xf]
        %v528 = vld [vmem:[%s412 + $0x1a0] sm:$0xf]
        %v529 = vld [vmem:[%s412 + $0x1a4] sm:$0xf]
        %v530 = vld [vmem:[%s412 + $0x1a8] sm:$0xf]
        %v531 = vld [vmem:[%s412 + $0x1ac] sm:$0xf]
        %v532 = vld [vmem:[%s412 + $0x1b0] sm:$0xf]
        %v533 = vld [vmem:[%s412 + $0x1b4] sm:$0xf]
        %v534 = vld [vmem:[%s412 + $0x1b8] sm:$0xf]
        %v535 = vld [vmem:[%s412 + $0x1bc] sm:$0xf]
        %v536 = vld [vmem:[%s412 + $0x1c0] sm:$0xf]
        %v537 = vld [vmem:[%s412 + $0x1c4] sm:$0xf]
        %v538 = vld [vmem:[%s412 + $0x1c8] sm:$0xf]
        %v539 = vld [vmem:[%s412 + $0x1cc] sm:$0xf]
        %v540 = vld [vmem:[%s412 + $0x1d0] sm:$0xf]
        %v541 = vld [vmem:[%s412 + $0x1d4] sm:$0xf]
        %v542 = vld [vmem:[%s412 + $0x1d8] sm:$0xf]
        %v543 = vld [vmem:[%s412 + $0x1dc] sm:$0xf]
        %v544 = vld [vmem:[%s412 + $0x1e0] sm:$0xf]
        %v545 = vld [vmem:[%s412 + $0x1e4] sm:$0xf]
        %v546 = vld [vmem:[%s412 + $0x1e8] sm:$0xf]
        %v547 = vld [vmem:[%s412 + $0x1ec] sm:$0xf]
        %v548 = vld [vmem:[%s412 + $0x1f0] sm:$0xf]
        %v549 = vld [vmem:[%s412 + $0x1f4] sm:$0xf]
        %v550 = vld [vmem:[%s412 + $0x1f8] sm:$0xf]
        %v551 = vld [vmem:[%s412 + $0x1fc] sm:$0xf]
        %v552 = vld [vmem:[#allocation2] sm:$0xff]
        %v553 = vld [vmem:[#allocation2 + $0x8] sm:$0x3]
        %v554 = vld [vmem:[%s361] sm:$0xff]
        %v555 = vld [vmem:[%s361 + $0x8] sm:$0xff]
        %v556 = vld [vmem:[%s361 + $0x10] sm:$0xff]
        %v557 = vld [vmem:[%s361 + $0x18] sm:$0xff]
        %v558 = vld [vmem:[%s361 + $0x20] sm:$0x11]
        %v559 = vld [vmem:[%s361 + $0x28] sm:$0x11]
        %v560 = vld [vmem:[%s361 + $0x30] sm:$0x11]
        %v561 = vld [vmem:[%s361 + $0x38] sm:$0x11]
        %v570 = vunpack.c.l.b16 %v554
        %v571 = vunpack.c.h.b16 %v554
        %v572 = vunpack.c.l.b16 %v555
        %v573 = vunpack.c.h.b16 %v555
        %v574 = vunpack.c.l.b16 %v556
        %v575 = vunpack.c.h.b16 %v556
        %v576 = vunpack.c.l.b16 %v557
        %v577 = vunpack.c.h.b16 %v557
        %v578 = vunpack.c.l.b16 %v558
        %v579 = vunpack.c.h.b16 %v558
        %v580 = vunpack.c.l.b16 %v559
        %v581 = vunpack.c.h.b16 %v559
        %v582 = vunpack.c.l.b16 %v560
        %v583 = vunpack.c.h.b16 %v560
        %v584 = vunpack.c.l.b16 %v561
        %v585 = vunpack.c.h.b16 %v561
        %v586 = vpack.c.b16 %v578, %v570
        %v587 = vpack.c.b16 %v579, %v571
        %v588 = vpack.c.b16 %v580, %v572
        %v589 = vpack.c.b16 %v581, %v573
        %v590 = vpack.c.b16 %v582, %v574
        %v591 = vpack.c.b16 %v583, %v575
        %v592 = vpack.c.b16 %v584, %v576
        %v593 = vpack.c.b16 %v585, %v577
        %v730 = vunpack.c.l.b16 %v424
        %v731 = vunpack.c.l.b16 %v425
        %v732 = vunpack.c.l.b16 %v426
        %v733 = vunpack.c.l.b16 %v427
        %v734 = vunpack.c.l.b16 %v428
        %v735 = vunpack.c.l.b16 %v429
        %v736 = vunpack.c.l.b16 %v430
        %v737 = vunpack.c.l.b16 %v431
        %v738 = vunpack.c.l.b16 %v432
        %v739 = vunpack.c.l.b16 %v433
        %v740 = vunpack.c.l.b16 %v434
        %v741 = vunpack.c.l.b16 %v435
        %v742 = vunpack.c.l.b16 %v436
        %v743 = vunpack.c.l.b16 %v437
        %v744 = vunpack.c.l.b16 %v438
        %v745 = vunpack.c.l.b16 %v439
        %v746 = vunpack.c.l.b16 %v440
        %v747 = vunpack.c.l.b16 %v441
        %v748 = vunpack.c.l.b16 %v442
        %v749 = vunpack.c.l.b16 %v443
        %v750 = vunpack.c.l.b16 %v444
        %v751 = vunpack.c.l.b16 %v445
        %v752 = vunpack.c.l.b16 %v446
        %v753 = vunpack.c.l.b16 %v447
        %v754 = vunpack.c.l.b16 %v448
        %v755 = vunpack.c.l.b16 %v449
        %v756 = vunpack.c.l.b16 %v450
        %v757 = vunpack.c.l.b16 %v451
        %v758 = vunpack.c.l.b16 %v452
        %v759 = vunpack.c.l.b16 %v453
        %v760 = vunpack.c.l.b16 %v454
        %v761 = vunpack.c.l.b16 %v455
        %v762 = vunpack.c.l.b16 %v456
        %v763 = vunpack.c.l.b16 %v457
        %v764 = vunpack.c.l.b16 %v458
        %v765 = vunpack.c.l.b16 %v459
        %v766 = vunpack.c.l.b16 %v460
        %v767 = vunpack.c.l.b16 %v461
        %v768 = vunpack.c.l.b16 %v462
        %v769 = vunpack.c.l.b16 %v463
        %v770 = vunpack.c.l.b16 %v464
        %v771 = vunpack.c.l.b16 %v465
        %v772 = vunpack.c.l.b16 %v466
        %v773 = vunpack.c.l.b16 %v467
        %v774 = vunpack.c.l.b16 %v468
        %v775 = vunpack.c.l.b16 %v469
        %v776 = vunpack.c.l.b16 %v470
        %v777 = vunpack.c.l.b16 %v471
        %v778 = vunpack.c.l.b16 %v472
        %v779 = vunpack.c.l.b16 %v473
        %v780 = vunpack.c.l.b16 %v474
        %v781 = vunpack.c.l.b16 %v475
        %v782 = vunpack.c.l.b16 %v476
        %v783 = vunpack.c.l.b16 %v477
        %v784 = vunpack.c.l.b16 %v478
        %v785 = vunpack.c.l.b16 %v479
        %v786 = vunpack.c.l.b16 %v480
        %v787 = vunpack.c.l.b16 %v481
        %v788 = vunpack.c.l.b16 %v482
        %v789 = vunpack.c.l.b16 %v483
        %v790 = vunpack.c.l.b16 %v484
        %v791 = vunpack.c.l.b16 %v485
        %v792 = vunpack.c.l.b16 %v486
        %v793 = vunpack.c.l.b16 %v487
        %v794 = vunpack.c.l.b16 %v488
        %v795 = vunpack.c.l.b16 %v489
        %v796 = vunpack.c.l.b16 %v490
        %v797 = vunpack.c.l.b16 %v491
        %v798 = vunpack.c.l.b16 %v492
        %v799 = vunpack.c.l.b16 %v493
        %v800 = vunpack.c.l.b16 %v494
        %v801 = vunpack.c.l.b16 %v495
        %v802 = vunpack.c.l.b16 %v496
        %v803 = vunpack.c.l.b16 %v497
        %v804 = vunpack.c.l.b16 %v498
        %v805 = vunpack.c.l.b16 %v499
        %v806 = vunpack.c.l.b16 %v500
        %v807 = vunpack.c.l.b16 %v501
        %v808 = vunpack.c.l.b16 %v502
        %v809 = vunpack.c.l.b16 %v503
        %v810 = vunpack.c.l.b16 %v504
        %v811 = vunpack.c.l.b16 %v505
        %v812 = vunpack.c.l.b16 %v506
        %v813 = vunpack.c.l.b16 %v507
        %v814 = vunpack.c.l.b16 %v508
        %v815 = vunpack.c.l.b16 %v509
        %v816 = vunpack.c.l.b16 %v510
        %v817 = vunpack.c.l.b16 %v511
        %v818 = vunpack.c.l.b16 %v512
        %v819 = vunpack.c.l.b16 %v513
        %v820 = vunpack.c.l.b16 %v514
        %v821 = vunpack.c.l.b16 %v515
        %v822 = vunpack.c.l.b16 %v516
        %v823 = vunpack.c.l.b16 %v517
        %v824 = vunpack.c.l.b16 %v518
        %v825 = vunpack.c.l.b16 %v519
        %v826 = vunpack.c.l.b16 %v520
        %v827 = vunpack.c.l.b16 %v521
        %v828 = vunpack.c.l.b16 %v522
        %v829 = vunpack.c.l.b16 %v523
        %v830 = vunpack.c.l.b16 %v524
        %v831 = vunpack.c.l.b16 %v525
        %v832 = vunpack.c.l.b16 %v526
        %v833 = vunpack.c.l.b16 %v527
        %v834 = vunpack.c.l.b16 %v528
        %v835 = vunpack.c.l.b16 %v529
        %v836 = vunpack.c.l.b16 %v530
        %v837 = vunpack.c.l.b16 %v531
        %v838 = vunpack.c.l.b16 %v532
        %v839 = vunpack.c.l.b16 %v533
        %v840 = vunpack.c.l.b16 %v534
        %v841 = vunpack.c.l.b16 %v535
        %v842 = vunpack.c.l.b16 %v536
        %v843 = vunpack.c.l.b16 %v537
        %v844 = vunpack.c.l.b16 %v538
        %v845 = vunpack.c.l.b16 %v539
        %v846 = vunpack.c.l.b16 %v540
        %v847 = vunpack.c.l.b16 %v541
        %v848 = vunpack.c.l.b16 %v542
        %v849 = vunpack.c.l.b16 %v543
        %v850 = vunpack.c.l.b16 %v544
        %v851 = vunpack.c.l.b16 %v545
        %v852 = vunpack.c.l.b16 %v546
        %v853 = vunpack.c.l.b16 %v547
        %v854 = vunpack.c.l.b16 %v548
        %v855 = vunpack.c.l.b16 %v549
        %v856 = vunpack.c.l.b16 %v550
        %v857 = vunpack.c.l.b16 %v551
        %v858 = vpack.c.b16 %v731, %v730
        %v859 = vpack.c.b16 %v733, %v732
        %v860 = vpack.c.b16 %v735, %v734
        %v861 = vpack.c.b16 %v737, %v736
        %v862 = vpack.c.b16 %v739, %v738
        %v863 = vpack.c.b16 %v741, %v740
        %v864 = vpack.c.b16 %v743, %v742
        %v865 = vpack.c.b16 %v745, %v744
        %v866 = vpack.c.b16 %v747, %v746
        %v867 = vpack.c.b16 %v749, %v748
        %v868 = vpack.c.b16 %v751, %v750
        %v869 = vpack.c.b16 %v753, %v752
        %v870 = vpack.c.b16 %v755, %v754
        %v871 = vpack.c.b16 %v757, %v756
        %v872 = vpack.c.b16 %v759, %v758
        %v873 = vpack.c.b16 %v761, %v760
        %v874 = vpack.c.b16 %v763, %v762
        %v875 = vpack.c.b16 %v765, %v764
        %v876 = vpack.c.b16 %v767, %v766
        %v877 = vpack.c.b16 %v769, %v768
        %v878 = vpack.c.b16 %v771, %v770
        %v879 = vpack.c.b16 %v773, %v772
        %v880 = vpack.c.b16 %v775, %v774
        %v881 = vpack.c.b16 %v777, %v776
        %v882 = vpack.c.b16 %v779, %v778
        %v883 = vpack.c.b16 %v781, %v780
        %v884 = vpack.c.b16 %v783, %v782
        %v885 = vpack.c.b16 %v785, %v784
        %v886 = vpack.c.b16 %v787, %v786
        %v887 = vpack.c.b16 %v789, %v788
        %v888 = vpack.c.b16 %v791, %v790
        %v889 = vpack.c.b16 %v793, %v792
        %v890 = vpack.c.b16 %v795, %v794
        %v891 = vpack.c.b16 %v797, %v796
        %v892 = vpack.c.b16 %v799, %v798
        %v893 = vpack.c.b16 %v801, %v800
        %v894 = vpack.c.b16 %v803, %v802
        %v895 = vpack.c.b16 %v805, %v804
        %v896 = vpack.c.b16 %v807, %v806
        %v897 = vpack.c.b16 %v809, %v808
        %v898 = vpack.c.b16 %v811, %v810
        %v899 = vpack.c.b16 %v813, %v812
        %v900 = vpack.c.b16 %v815, %v814
        %v901 = vpack.c.b16 %v817, %v816
        %v902 = vpack.c.b16 %v819, %v818
        %v903 = vpack.c.b16 %v821, %v820
        %v904 = vpack.c.b16 %v823, %v822
        %v905 = vpack.c.b16 %v825, %v824
        %v906 = vpack.c.b16 %v827, %v826
        %v907 = vpack.c.b16 %v829, %v828
        %v908 = vpack.c.b16 %v831, %v830
        %v909 = vpack.c.b16 %v833, %v832
        %v910 = vpack.c.b16 %v835, %v834
        %v911 = vpack.c.b16 %v837, %v836
        %v912 = vpack.c.b16 %v839, %v838
        %v913 = vpack.c.b16 %v841, %v840
        %v914 = vpack.c.b16 %v843, %v842
        %v915 = vpack.c.b16 %v845, %v844
        %v916 = vpack.c.b16 %v847, %v846
        %v917 = vpack.c.b16 %v849, %v848
        %v918 = vpack.c.b16 %v851, %v850
        %v919 = vpack.c.b16 %v853, %v852
        %v920 = vpack.c.b16 %v855, %v854
        %v921 = vpack.c.b16 %v857, %v856
        %986 = vmatprep.subr.bf16.mxu0 0
        %987 = vmatpush1.bf16.msra.mxu0 %v865
        %988 = vmatprep.subr.bf16.mxu0 0
        %989 = vmatpush1.bf16.msra.mxu0 %v864
        %990 = vmatprep.subr.bf16.mxu0 0
        %991 = vmatpush1.bf16.msra.mxu0 %v863
        %992 = vmatprep.subr.bf16.mxu0 0
        %993 = vmatpush1.bf16.msra.mxu0 %v862
        %994 = vmatprep.subr.bf16.mxu0 0
        %995 = vmatpush1.bf16.msra.mxu0 %v861
        %996 = vmatprep.subr.bf16.mxu0 0
        %997 = vmatpush1.bf16.msra.mxu0 %v860
        %998 = vmatprep.subr.bf16.mxu0 0
        %999 = vmatpush1.bf16.msra.mxu0 %v859
        %1000 = vmatprep.subr.bf16.mxu0 0
        %1001 = vmatpush1.bf16.msra.mxu0 %v858
        %1002 = vmatprep.subr.bf16.mxu0 0
        %1003 = vmatpush2.bf16.msra.mxu0 %v873
        %1004 = vmatprep.subr.bf16.mxu0 0
        %1005 = vmatpush2.bf16.msra.mxu0 %v872
        %1006 = vmatprep.subr.bf16.mxu0 0
        %1007 = vmatpush2.bf16.msra.mxu0 %v871
        %1008 = vmatprep.subr.bf16.mxu0 0
        %1009 = vmatpush2.bf16.msra.mxu0 %v870
        %1010 = vmatprep.subr.bf16.mxu0 0
        %1011 = vmatpush2.bf16.msra.mxu0 %v869
        %1012 = vmatprep.subr.bf16.mxu0 0
        %1013 = vmatpush2.bf16.msra.mxu0 %v868
        %1014 = vmatprep.subr.bf16.mxu0 0
        %1015 = vmatpush2.bf16.msra.mxu0 %v867
        %1016 = vmatprep.subr.bf16.mxu0 0
        %1017 = vmatpush2.bf16.msra.mxu0 %v866
        %1018 = vmatprep.mubr.bf16.mxu0 %v587
        %1019 = vmatmul.mubr.bf16.gmra.mxu0 %v586
        %v1020 = vpop.f32.mrf.mxu0
        %v1021 = vadd.f32 0.0, %v1020
        %v1022 = vpop.f32.mrf.mxu0
        %v1023 = vpop.f32.mrf.mxu0
        %v1024 = vadd.f32 0.0, %v1023
        %v1025 = vpop.f32.mrf.mxu0
        %1026 = vdwg.mxu0
        %1027 = vmatprep.subr.bf16.mxu0 0
        %1028 = vmatpush1.bf16.msra.mxu0 %v881
        %1029 = vmatprep.subr.bf16.mxu0 0
        %1030 = vmatpush1.bf16.msra.mxu0 %v880
        %1031 = vmatprep.subr.bf16.mxu0 0
        %1032 = vmatpush1.bf16.msra.mxu0 %v879
        %1033 = vmatprep.subr.bf16.mxu0 0
        %1034 = vmatpush1.bf16.msra.mxu0 %v878
        %1035 = vmatprep.subr.bf16.mxu0 0
        %1036 = vmatpush1.bf16.msra.mxu0 %v877
        %1037 = vmatprep.subr.bf16.mxu0 0
        %1038 = vmatpush1.bf16.msra.mxu0 %v876
        %1039 = vmatprep.subr.bf16.mxu0 0
        %1040 = vmatpush1.bf16.msra.mxu0 %v875
        %1041 = vmatprep.subr.bf16.mxu0 0
        %1042 = vmatpush1.bf16.msra.mxu0 %v874
        %1043 = vmatprep.subr.bf16.mxu0 0
        %1044 = vmatpush2.bf16.msra.mxu0 %v889
        %1045 = vmatprep.subr.bf16.mxu0 0
        %1046 = vmatpush2.bf16.msra.mxu0 %v888
        %1047 = vmatprep.subr.bf16.mxu0 0
        %1048 = vmatpush2.bf16.msra.mxu0 %v887
        %1049 = vmatprep.subr.bf16.mxu0 0
        %1050 = vmatpush2.bf16.msra.mxu0 %v886
        %1051 = vmatprep.subr.bf16.mxu0 0
        %1052 = vmatpush2.bf16.msra.mxu0 %v885
        %1053 = vmatprep.subr.bf16.mxu0 0
        %1054 = vmatpush2.bf16.msra.mxu0 %v884
        %1055 = vmatprep.subr.bf16.mxu0 0
        %1056 = vmatpush2.bf16.msra.mxu0 %v883
        %1057 = vmatprep.subr.bf16.mxu0 0
        %1058 = vmatpush2.bf16.msra.mxu0 %v882
        %1059 = vmatprep.mubr.bf16.mxu0 %v589
        %1060 = vmatmul.mubr.bf16.gmra.mxu0 %v588
        %v1061 = vpop.f32.mrf.mxu0
        %v1062 = vadd.f32 %v1021, %v1061
        %v1063 = vpop.f32.mrf.mxu0
        %v1064 = vpop.f32.mrf.mxu0
        %v1065 = vadd.f32 %v1024, %v1064
        %v1066 = vpop.f32.mrf.mxu0
        %1067 = vdwg.mxu0
        %1068 = vmatprep.subr.bf16.mxu0 0
        %1069 = vmatpush1.bf16.msra.mxu0 %v897
        %1070 = vmatprep.subr.bf16.mxu0 0
        %1071 = vmatpush1.bf16.msra.mxu0 %v896
        %1072 = vmatprep.subr.bf16.mxu0 0
        %1073 = vmatpush1.bf16.msra.mxu0 %v895
        %1074 = vmatprep.subr.bf16.mxu0 0
        %1075 = vmatpush1.bf16.msra.mxu0 %v894
        %1076 = vmatprep.subr.bf16.mxu0 0
        %1077 = vmatpush1.bf16.msra.mxu0 %v893
        %1078 = vmatprep.subr.bf16.mxu0 0
        %1079 = vmatpush1.bf16.msra.mxu0 %v892
        %1080 = vmatprep.subr.bf16.mxu0 0
        %1081 = vmatpush1.bf16.msra.mxu0 %v891
        %1082 = vmatprep.subr.bf16.mxu0 0
        %1083 = vmatpush1.bf16.msra.mxu0 %v890
        %1084 = vmatprep.subr.bf16.mxu0 0
        %1085 = vmatpush2.bf16.msra.mxu0 %v905
        %1086 = vmatprep.subr.bf16.mxu0 0
        %1087 = vmatpush2.bf16.msra.mxu0 %v904
        %1088 = vmatprep.subr.bf16.mxu0 0
        %1089 = vmatpush2.bf16.msra.mxu0 %v903
        %1090 = vmatprep.subr.bf16.mxu0 0
        %1091 = vmatpush2.bf16.msra.mxu0 %v902
        %1092 = vmatprep.subr.bf16.mxu0 0
        %1093 = vmatpush2.bf16.msra.mxu0 %v901
        %1094 = vmatprep.subr.bf16.mxu0 0
        %1095 = vmatpush2.bf16.msra.mxu0 %v900
        %1096 = vmatprep.subr.bf16.mxu0 0
        %1097 = vmatpush2.bf16.msra.mxu0 %v899
        %1098 = vmatprep.subr.bf16.mxu0 0
        %1099 = vmatpush2.bf16.msra.mxu0 %v898
        %1100 = vmatprep.mubr.bf16.mxu0 %v591
        %1101 = vmatmul.mubr.bf16.gmra.mxu0 %v590
        %v1102 = vpop.f32.mrf.mxu0
        %v1103 = vadd.f32 %v1062, %v1102
        %v1104 = vpop.f32.mrf.mxu0
        %v1105 = vpop.f32.mrf.mxu0
        %v1106 = vadd.f32 %v1065, %v1105
        %v1107 = vpop.f32.mrf.mxu0
        %1108 = vdwg.mxu0
        %1109 = vmatprep.subr.bf16.mxu0 0
        %1110 = vmatpush1.bf16.msra.mxu0 %v913
        %1111 = vmatprep.subr.bf16.mxu0 0
        %1112 = vmatpush1.bf16.msra.mxu0 %v912
        %1113 = vmatprep.subr.bf16.mxu0 0
        %1114 = vmatpush1.bf16.msra.mxu0 %v911
        %1115 = vmatprep.subr.bf16.mxu0 0
        %1116 = vmatpush1.bf16.msra.mxu0 %v910
        %1117 = vmatprep.subr.bf16.mxu0 0
        %1118 = vmatpush1.bf16.msra.mxu0 %v909
        %1119 = vmatprep.subr.bf16.mxu0 0
        %1120 = vmatpush1.bf16.msra.mxu0 %v908
        %1121 = vmatprep.subr.bf16.mxu0 0
        %1122 = vmatpush1.bf16.msra.mxu0 %v907
        %1123 = vmatprep.subr.bf16.mxu0 0
        %1124 = vmatpush1.bf16.msra.mxu0 %v906
        %1125 = vmatprep.subr.bf16.mxu0 0
        %1126 = vmatpush2.bf16.msra.mxu0 %v921
        %1127 = vmatprep.subr.bf16.mxu0 0
        %1128 = vmatpush2.bf16.msra.mxu0 %v920
        %1129 = vmatprep.subr.bf16.mxu0 0
        %1130 = vmatpush2.bf16.msra.mxu0 %v919
        %1131 = vmatprep.subr.bf16.mxu0 0
        %1132 = vmatpush2.bf16.msra.mxu0 %v918
        %1133 = vmatprep.subr.bf16.mxu0 0
        %1134 = vmatpush2.bf16.msra.mxu0 %v917
        %1135 = vmatprep.subr.bf16.mxu0 0
        %1136 = vmatpush2.bf16.msra.mxu0 %v916
        %1137 = vmatprep.subr.bf16.mxu0 0
        %1138 = vmatpush2.bf16.msra.mxu0 %v915
        %1139 = vmatprep.subr.bf16.mxu0 0
        %1140 = vmatpush2.bf16.msra.mxu0 %v914
        %1141 = vmatprep.mubr.bf16.mxu0 %v593
        %1142 = vmatmul.mubr.bf16.gmra.mxu0 %v592
        %v1143 = vpop.f32.mrf.mxu0
        %v1144 = vadd.f32 %v1103, %v1143
        %v1145 = vpop.f32.mrf.mxu0
        %v1146 = vpop.f32.mrf.mxu0
        %v1147 = vadd.f32 %v1106, %v1146
        %v1148 = vpop.f32.mrf.mxu0
        %1149 = vdwg.mxu0
        %v1150 = vadd.f32 %v552, %v1144
        %v1151 = vadd.f32 %v553, %v1147
        %vm1152 = vcmask 523264
        %1153 = vst.msk [vmem:[#allocation2] sm:$0xff] %vm1152, %v1150
        %vm1154 = vcmask 517120
        %1155 = vst.msk [vmem:[#allocation2 + $0x8] sm:$0x3] %vm1154, %v1151
        %v1156 = vld [vmem:[#allocation3] sm:$0xff]
        %v1157 = vld [vmem:[%s406] sm:$0xff]
        %v1158 = vld [vmem:[%s406 + $0x8] sm:$0xff]
        %v1159 = vld [vmem:[%s406 + $0x10] sm:$0xff]
        %v1160 = vld [vmem:[%s406 + $0x18] sm:$0xff]
        %v1165 = vunpack.c.l.b16 %v1157
        %v1166 = vunpack.c.h.b16 %v1157
        %v1167 = vunpack.c.l.b16 %v1158
        %v1168 = vunpack.c.h.b16 %v1158
        %v1169 = vunpack.c.l.b16 %v1159
        %v1170 = vunpack.c.h.b16 %v1159
        %v1171 = vunpack.c.l.b16 %v1160
        %v1172 = vunpack.c.h.b16 %v1160
        %v1173 = vpack.c.b16 %v1165, %v1165
        %v1174 = vpack.c.b16 %v1166, %v1166
        %v1175 = vpack.c.b16 %v1167, %v1167
        %v1176 = vpack.c.b16 %v1168, %v1168
        %v1177 = vpack.c.b16 %v1169, %v1169
        %v1178 = vpack.c.b16 %v1170, %v1170
        %v1179 = vpack.c.b16 %v1171, %v1171
        %v1180 = vpack.c.b16 %v1172, %v1172
        %1189 = vmatprep.subr.bf16.mxu0 0
        %1190 = vmatpush1.bf16.msra.mxu0 %v865
        %1191 = vmatprep.subr.bf16.mxu0 0
        %1192 = vmatpush1.bf16.msra.mxu0 %v864
        %1193 = vmatprep.subr.bf16.mxu0 0
        %1194 = vmatpush1.bf16.msra.mxu0 %v863
        %1195 = vmatprep.subr.bf16.mxu0 0
        %1196 = vmatpush1.bf16.msra.mxu0 %v862
        %1197 = vmatprep.subr.bf16.mxu0 0
        %1198 = vmatpush1.bf16.msra.mxu0 %v861
        %1199 = vmatprep.subr.bf16.mxu0 0
        %1200 = vmatpush1.bf16.msra.mxu0 %v860
        %1201 = vmatprep.subr.bf16.mxu0 0
        %1202 = vmatpush1.bf16.msra.mxu0 %v859
        %1203 = vmatprep.subr.bf16.mxu0 0
        %1204 = vmatpush1.bf16.msra.mxu0 %v858
        %1205 = vmatprep.subr.bf16.mxu0 0
        %1206 = vmatpush2.bf16.msra.mxu0 %v873
        %1207 = vmatprep.subr.bf16.mxu0 0
        %1208 = vmatpush2.bf16.msra.mxu0 %v872
        %1209 = vmatprep.subr.bf16.mxu0 0
        %1210 = vmatpush2.bf16.msra.mxu0 %v871
        %1211 = vmatprep.subr.bf16.mxu0 0
        %1212 = vmatpush2.bf16.msra.mxu0 %v870
        %1213 = vmatprep.subr.bf16.mxu0 0
        %1214 = vmatpush2.bf16.msra.mxu0 %v869
        %1215 = vmatprep.subr.bf16.mxu0 0
        %1216 = vmatpush2.bf16.msra.mxu0 %v868
        %1217 = vmatprep.subr.bf16.mxu0 0
        %1218 = vmatpush2.bf16.msra.mxu0 %v867
        %1219 = vmatprep.subr.bf16.mxu0 0
        %1220 = vmatpush2.bf16.msra.mxu0 %v866
        %1221 = vmatprep.mubr.bf16.mxu0 %v1174
        %1222 = vmatmul.mubr.bf16.gmra.mxu0 %v1173
        %v1223 = vpop.f32.mrf.mxu0
        %v1224 = vadd.f32 0.0, %v1223
        %v1225 = vpop.f32.mrf.mxu0
        %v1226 = vpop.f32.mrf.mxu0
        %v1227 = vpop.f32.mrf.mxu0
        %1228 = vdwg.mxu0
        %1229 = vmatprep.subr.bf16.mxu0 0
        %1230 = vmatpush1.bf16.msra.mxu0 %v881
        %1231 = vmatprep.subr.bf16.mxu0 0
        %1232 = vmatpush1.bf16.msra.mxu0 %v880
        %1233 = vmatprep.subr.bf16.mxu0 0
        %1234 = vmatpush1.bf16.msra.mxu0 %v879
        %1235 = vmatprep.subr.bf16.mxu0 0
        %1236 = vmatpush1.bf16.msra.mxu0 %v878
        %1237 = vmatprep.subr.bf16.mxu0 0
        %1238 = vmatpush1.bf16.msra.mxu0 %v877
        %1239 = vmatprep.subr.bf16.mxu0 0
        %1240 = vmatpush1.bf16.msra.mxu0 %v876
        %1241 = vmatprep.subr.bf16.mxu0 0
        %1242 = vmatpush1.bf16.msra.mxu0 %v875
        %1243 = vmatprep.subr.bf16.mxu0 0
        %1244 = vmatpush1.bf16.msra.mxu0 %v874
        %1245 = vmatprep.subr.bf16.mxu0 0
        %1246 = vmatpush2.bf16.msra.mxu0 %v889
        %1247 = vmatprep.subr.bf16.mxu0 0
        %1248 = vmatpush2.bf16.msra.mxu0 %v888
        %1249 = vmatprep.subr.bf16.mxu0 0
        %1250 = vmatpush2.bf16.msra.mxu0 %v887
        %1251 = vmatprep.subr.bf16.mxu0 0
        %1252 = vmatpush2.bf16.msra.mxu0 %v886
        %1253 = vmatprep.subr.bf16.mxu0 0
        %1254 = vmatpush2.bf16.msra.mxu0 %v885
        %1255 = vmatprep.subr.bf16.mxu0 0
        %1256 = vmatpush2.bf16.msra.mxu0 %v884
        %1257 = vmatprep.subr.bf16.mxu0 0
        %1258 = vmatpush2.bf16.msra.mxu0 %v883
        %1259 = vmatprep.subr.bf16.mxu0 0
        %1260 = vmatpush2.bf16.msra.mxu0 %v882
        %1261 = vmatprep.mubr.bf16.mxu0 %v1176
        %1262 = vmatmul.mubr.bf16.gmra.mxu0 %v1175
        %v1263 = vpop.f32.mrf.mxu0
        %v1264 = vadd.f32 %v1224, %v1263
        %v1265 = vpop.f32.mrf.mxu0
        %v1266 = vpop.f32.mrf.mxu0
        %v1267 = vpop.f32.mrf.mxu0
        %1268 = vdwg.mxu0
        %1269 = vmatprep.subr.bf16.mxu0 0
        %1270 = vmatpush1.bf16.msra.mxu0 %v897
        %1271 = vmatprep.subr.bf16.mxu0 0
        %1272 = vmatpush1.bf16.msra.mxu0 %v896
        %1273 = vmatprep.subr.bf16.mxu0 0
        %1274 = vmatpush1.bf16.msra.mxu0 %v895
        %1275 = vmatprep.subr.bf16.mxu0 0
        %1276 = vmatpush1.bf16.msra.mxu0 %v894
        %1277 = vmatprep.subr.bf16.mxu0 0
        %1278 = vmatpush1.bf16.msra.mxu0 %v893
        %1279 = vmatprep.subr.bf16.mxu0 0
        %1280 = vmatpush1.bf16.msra.mxu0 %v892
        %1281 = vmatprep.subr.bf16.mxu0 0
        %1282 = vmatpush1.bf16.msra.mxu0 %v891
        %1283 = vmatprep.subr.bf16.mxu0 0
        %1284 = vmatpush1.bf16.msra.mxu0 %v890
        %1285 = vmatprep.subr.bf16.mxu0 0
        %1286 = vmatpush2.bf16.msra.mxu0 %v905
        %1287 = vmatprep.subr.bf16.mxu0 0
        %1288 = vmatpush2.bf16.msra.mxu0 %v904
        %1289 = vmatprep.subr.bf16.mxu0 0
        %1290 = vmatpush2.bf16.msra.mxu0 %v903
        %1291 = vmatprep.subr.bf16.mxu0 0
        %1292 = vmatpush2.bf16.msra.mxu0 %v902
        %1293 = vmatprep.subr.bf16.mxu0 0
        %1294 = vmatpush2.bf16.msra.mxu0 %v901
        %1295 = vmatprep.subr.bf16.mxu0 0
        %1296 = vmatpush2.bf16.msra.mxu0 %v900
        %1297 = vmatprep.subr.bf16.mxu0 0
        %1298 = vmatpush2.bf16.msra.mxu0 %v899
        %1299 = vmatprep.subr.bf16.mxu0 0
        %1300 = vmatpush2.bf16.msra.mxu0 %v898
        %1301 = vmatprep.mubr.bf16.mxu0 %v1178
        %1302 = vmatmul.mubr.bf16.gmra.mxu0 %v1177
        %v1303 = vpop.f32.mrf.mxu0
        %v1304 = vadd.f32 %v1264, %v1303
        %v1305 = vpop.f32.mrf.mxu0
        %v1306 = vpop.f32.mrf.mxu0
        %v1307 = vpop.f32.mrf.mxu0
        %1308 = vdwg.mxu0
        %1309 = vmatprep.subr.bf16.mxu0 0
        %1310 = vmatpush1.bf16.msra.mxu0 %v913
        %1311 = vmatprep.subr.bf16.mxu0 0
        %1312 = vmatpush1.bf16.msra.mxu0 %v912
        %1313 = vmatprep.subr.bf16.mxu0 0
        %1314 = vmatpush1.bf16.msra.mxu0 %v911
        %1315 = vmatprep.subr.bf16.mxu0 0
        %1316 = vmatpush1.bf16.msra.mxu0 %v910
        %1317 = vmatprep.subr.bf16.mxu0 0
        %1318 = vmatpush1.bf16.msra.mxu0 %v909
        %1319 = vmatprep.subr.bf16.mxu0 0
        %1320 = vmatpush1.bf16.msra.mxu0 %v908
        %1321 = vmatprep.subr.bf16.mxu0 0
        %1322 = vmatpush1.bf16.msra.mxu0 %v907
        %1323 = vmatprep.subr.bf16.mxu0 0
        %1324 = vmatpush1.bf16.msra.mxu0 %v906
        %1325 = vmatprep.subr.bf16.mxu0 0
        %1326 = vmatpush2.bf16.msra.mxu0 %v921
        %1327 = vmatprep.subr.bf16.mxu0 0
        %1328 = vmatpush2.bf16.msra.mxu0 %v920
        %1329 = vmatprep.subr.bf16.mxu0 0
        %1330 = vmatpush2.bf16.msra.mxu0 %v919
        %1331 = vmatprep.subr.bf16.mxu0 0
        %1332 = vmatpush2.bf16.msra.mxu0 %v918
        %1333 = vmatprep.subr.bf16.mxu0 0
        %1334 = vmatpush2.bf16.msra.mxu0 %v917
        %1335 = vmatprep.subr.bf16.mxu0 0
        %1336 = vmatpush2.bf16.msra.mxu0 %v916
        %1337 = vmatprep.subr.bf16.mxu0 0
        %1338 = vmatpush2.bf16.msra.mxu0 %v915
        %1339 = vmatprep.subr.bf16.mxu0 0
        %1340 = vmatpush2.bf16.msra.mxu0 %v914
        %1341 = vmatprep.mubr.bf16.mxu0 %v1180
        %1342 = vmatmul.mubr.bf16.gmra.mxu0 %v1179
        %v1343 = vpop.f32.mrf.mxu0
        %v1344 = vadd.f32 %v1304, %v1343
        %v1345 = vpop.f32.mrf.mxu0
        %v1346 = vpop.f32.mrf.mxu0
        %v1347 = vpop.f32.mrf.mxu0
        %1348 = vdwg.mxu0
        %v1349 = vadd.f32 %v1156, %v1344
        %1350 = vst.msk [vmem:[#allocation3] sm:$0xff] %vm1152, %v1349
        %p1351 = scmp.eq.s32.totalorder %s26, 2
        // Predicated region
        $region68: #{tpu_custom_call.1} parent=58 // pred_check
          %p1352 = pneg %p1351
        $region69: #{tpu_custom_call.1} parent=58 // pred_check_branch
          %1354 = sbr.rel (%p1352) target = $region71
        $region70: #{tpu_custom_call.1} parent=58 // pred_region
          %v1355 = vld [vmem:[%s3] sm:$0x1]
          %v1356 = vld [vmem:[#allocation2] sm:$0xff]
          %v1357 = vld [vmem:[#allocation2 + $0x8] sm:$0x3]
          %v1359 = vlaneseq
          %v1360 = vshrl.u32 %v1359, 7
          %v1361 = vsub.s32 0, %v1360
          %v1362 = vrot.slane %v1355, %v1361
          %v1364 = vadd.f32 %v1356, %v1362
          %v1365 = vadd.f32 %v1357, %v1362
          %v1366 = vmax.f32 %v1364, 0.0
          %v1367 = vmax.f32 %v1365, 0.0
          %v1368 = vld [vmem:[#allocation3] sm:$0xff]
          %v1369 = vadd.f32 %v1368, %v1362
          %v1370 = vmax.f32 %v1369, 0.0
          %1371 = vst.msk [vmem:[#allocation5] sm:$0xff] %vm1152, %v1366
          %1372 = vst.msk [vmem:[#allocation5 + $0x8] sm:$0x3] %vm1154, %v1367
          %1373 = vst.msk [vmem:[#allocation10] sm:$0xff] %vm1152, %v1370
          %v1374 = vld [vmem:[%s4] sm:$0x1f]
          %vm1375 = vcmask 80896
          %v1377 = vsel %vm1375, %v1374, 0
          %vm1379 = vcmask 1041408
          %v1381 = vsel %vm1379, %v1367, 0
          %1383 = vmatprep.subr.mxu0 0.0
          %1384 = vmatpush1.msra.mxu0 0.0
          %1385 = vmatprep.subr.mxu0 0.0
          %1386 = vmatpush1.msra.mxu0 0.0
          %1387 = vmatprep.subr.mxu0 0.0
          %1388 = vmatpush1.msra.mxu0 0.0
          %1389 = vmatprep.subr.mxu0 0.0
          %1390 = vmatpush1.msra.mxu0 0.0
          %1391 = vmatprep.subr.mxu0 0.0
          %1392 = vmatpush1.msra.mxu0 0.0
          %1393 = vmatprep.subr.mxu0 0.0
          %1394 = vmatpush1.msra.mxu0 0.0
          %1395 = vmatprep.subr.mxu0 0.0
          %1396 = vmatpush1.msra.mxu0 0.0
          %1397 = vmatprep.subr.mxu0 0.0
          %1398 = vmatpush1.msra.mxu0 0.0
          %1399 = vmatprep.subr.mxu0 0.0
          %1400 = vmatpush1.msra.mxu0 0.0
          %1401 = vmatprep.subr.mxu0 0.0
          %1402 = vmatpush1.msra.mxu0 0.0
          %1403 = vmatprep.subr.mxu0 0.0
          %1404 = vmatpush1.msra.mxu0 0.0
          %1405 = vmatprep.subr.mxu0 0.0
          %1406 = vmatpush1.msra.mxu0 0.0
          %1407 = vmatprep.subr.mxu0 0.0
          %1408 = vmatpush1.msra.mxu0 0.0
          %1409 = vmatprep.subr.mxu0 0.0
          %1410 = vmatpush1.msra.mxu0 0.0
          %1411 = vmatprep.subr.mxu0 0.0
          %1412 = vmatpush1.msra.mxu0 %v1381
          %1413 = vmatprep.subr.mxu0 0.0
          %1414 = vmatpush1.msra.mxu0 %v1366
          %1415 = vmatprep.subr.mxu0 0.0
          %1416 = vmatpush2.msra.mxu0 0.0
          %1417 = vmatprep.subr.mxu0 0.0
          %1418 = vmatpush2.msra.mxu0 0.0
          %1419 = vmatprep.subr.mxu0 0.0
          %1420 = vmatpush2.msra.mxu0 0.0
          %1421 = vmatprep.subr.mxu0 0.0
          %1422 = vmatpush2.msra.mxu0 0.0
          %1423 = vmatprep.subr.mxu0 0.0
          %1424 = vmatpush2.msra.mxu0 0.0
          %1425 = vmatprep.subr.mxu0 0.0
          %1426 = vmatpush2.msra.mxu0 0.0
          %1427 = vmatprep.subr.mxu0 0.0
          %1428 = vmatpush2.msra.mxu0 0.0
          %1429 = vmatprep.subr.mxu0 0.0
          %1430 = vmatpush2.msra.mxu0 0.0
          %1431 = vmatprep.subr.mxu0 0.0
          %1432 = vmatpush2.msra.mxu0 0.0
          %1433 = vmatprep.subr.mxu0 0.0
          %1434 = vmatpush2.msra.mxu0 0.0
          %1435 = vmatprep.subr.mxu0 0.0
          %1436 = vmatpush2.msra.mxu0 0.0
          %1437 = vmatprep.subr.mxu0 0.0
          %1438 = vmatpush2.msra.mxu0 0.0
          %1439 = vmatprep.subr.mxu0 0.0
          %1440 = vmatpush2.msra.mxu0 0.0
          %1441 = vmatprep.subr.mxu0 0.0
          %1442 = vmatpush2.msra.mxu0 0.0
          %1443 = vmatprep.subr.mxu0 0.0
          %1444 = vmatpush2.msra.mxu0 0.0
          %1445 = vmatprep.subr.mxu0 0.0
          %1446 = vmatpush2.msra.mxu0 0.0
          %1447 = vmatprep.mubr.f32.mxu0 0.0
          %1448 = vmatmul.mubr.f32.gmra.mxu0 %v1377
          %v1449 = vpop.f32.mrf.mxu0
          %v1450 = vadd.f32 0.0, %v1449
          %v1451 = vpop.f32.mrf.mxu0
          %1452 = vdwg.mxu0
          %vm1453 = vcmask 520192
          %1454 = vst.msk [vmem:[#allocation7] sm:$0x1f] %vm1453, %v1450
          %v1455 = vmul.f32 %v1450, %v1450
          %v1457 = vsel %vm1152, 1.0, 0
          %v1460 = vsel %vm1152, %v1455, 0
          %1462 = vmatprep.subr.mxu0 0.0
          %1463 = vmatpush1.xpose.msra.mxu0 0.0
          %1464 = vmatprep.subr.mxu0 0.0
          %1465 = vmatpush1.xpose.msra.mxu0 0.0
          %1466 = vmatprep.subr.mxu0 0.0
          %1467 = vmatpush1.xpose.msra.mxu0 0.0
          %1468 = vmatprep.subr.mxu0 0.0
          %1469 = vmatpush1.xpose.msra.mxu0 0.0
          %1470 = vmatprep.subr.mxu0 0.0
          %1471 = vmatpush1.xpose.msra.mxu0 0.0
          %1472 = vmatprep.subr.mxu0 0.0
          %1473 = vmatpush1.xpose.msra.mxu0 0.0
          %1474 = vmatprep.subr.mxu0 0.0
          %1475 = vmatpush1.xpose.msra.mxu0 0.0
          %1476 = vmatprep.subr.mxu0 0.0
          %1477 = vmatpush1.xpose.msra.mxu0 0.0
          %1478 = vmatprep.subr.mxu0 0.0
          %1479 = vmatpush1.xpose.msra.mxu0 0.0
          %1480 = vmatprep.subr.mxu0 0.0
          %1481 = vmatpush1.xpose.msra.mxu0 0.0
          %1482 = vmatprep.subr.mxu0 0.0
          %1483 = vmatpush1.xpose.msra.mxu0 0.0
          %1484 = vmatprep.subr.mxu0 0.0
          %1485 = vmatpush1.xpose.msra.mxu0 0.0
          %1486 = vmatprep.subr.mxu0 0.0
          %1487 = vmatpush1.xpose.msra.mxu0 0.0
          %1488 = vmatprep.subr.mxu0 0.0
          %1489 = vmatpush1.xpose.msra.mxu0 0.0
          %1490 = vmatprep.subr.mxu0 0.0
          %1491 = vmatpush1.xpose.msra.mxu0 0.0
          %1492 = vmatprep.subr.mxu0 0.0
          %1493 = vmatpush1.xpose.msra.mxu0 %v1460
          %1494 = vmatprep.subr.mxu0 0.0
          %1495 = vmatpush2.xpose.msra.mxu0 0.0
          %1496 = vmatprep.subr.mxu0 0.0
          %1497 = vmatpush2.xpose.msra.mxu0 0.0
          %1498 = vmatprep.subr.mxu0 0.0
          %1499 = vmatpush2.xpose.msra.mxu0 0.0
          %1500 = vmatprep.subr.mxu0 0.0
          %1501 = vmatpush2.xpose.msra.mxu0 0.0
          %1502 = vmatprep.subr.mxu0 0.0
          %1503 = vmatpush2.xpose.msra.mxu0 0.0
          %1504 = vmatprep.subr.mxu0 0.0
          %1505 = vmatpush2.xpose.msra.mxu0 0.0
          %1506 = vmatprep.subr.mxu0 0.0
          %1507 = vmatpush2.xpose.msra.mxu0 0.0
          %1508 = vmatprep.subr.mxu0 0.0
          %1509 = vmatpush2.xpose.msra.mxu0 0.0
          %1510 = vmatprep.subr.mxu0 0.0
          %1511 = vmatpush2.xpose.msra.mxu0 0.0
          %1512 = vmatprep.subr.mxu0 0.0
          %1513 = vmatpush2.xpose.msra.mxu0 0.0
          %1514 = vmatprep.subr.mxu0 0.0
          %1515 = vmatpush2.xpose.msra.mxu0 0.0
          %1516 = vmatprep.subr.mxu0 0.0
          %1517 = vmatpush2.xpose.msra.mxu0 0.0
          %1518 = vmatprep.subr.mxu0 0.0
          %1519 = vmatpush2.xpose.msra.mxu0 0.0
          %1520 = vmatprep.subr.mxu0 0.0
          %1521 = vmatpush2.xpose.msra.mxu0 0.0
          %1522 = vmatprep.subr.mxu0 0.0
          %1523 = vmatpush2.xpose.msra.mxu0 0.0
          %1524 = vmatprep.subr.mxu0 0.0
          %1525 = vmatpush2.xpose.msra.mxu0 0.0
          %1526 = vmatprep.mubr.f32.mxu0 0.0
          %1527 = vmatmul.mubr.f32.gmra.mxu0 %v1457
          %v1528 = vpop.f32.mrf.mxu0
          %v1529 = vadd.f32 0.0, %v1528
          %v1530 = vpop.f32.mrf.mxu0
          %1531 = vdwg.mxu0
          %vm1532 = vcmask 32768
          %1533 = vst.msk [vmem:[#allocation9] sm:$0x1] %vm1532, %v1529
          %v1534 = vmul.f32 %v1370, %v1370
          %v1535 = vsel %vm1152, %v1534, 0.0
          %1536 = vadd.xlane.f32.xlu0 %v1535
          %v1537 = vpop.xlane.xlu0 %1536
          %v1539 = vsel %vm1152, %v1370, 0
          %v1542 = vsel %vm1152, %v1450, 0
          %1544 = vmatprep.subr.mxu0 0.0
          %1545 = vmatpush1.xpose.msra.mxu0 0.0
          %1546 = vmatprep.subr.mxu0 0.0
          %1547 = vmatpush1.xpose.msra.mxu0 0.0
          %1548 = vmatprep.subr.mxu0 0.0
          %1549 = vmatpush1.xpose.msra.mxu0 0.0
          %1550 = vmatprep.subr.mxu0 0.0
          %1551 = vmatpush1.xpose.msra.mxu0 0.0
          %1552 = vmatprep.subr.mxu0 0.0
          %1553 = vmatpush1.xpose.msra.mxu0 0.0
          %1554 = vmatprep.subr.mxu0 0.0
          %1555 = vmatpush1.xpose.msra.mxu0 0.0
          %1556 = vmatprep.subr.mxu0 0.0
          %1557 = vmatpush1.xpose.msra.mxu0 0.0
          %1558 = vmatprep.subr.mxu0 0.0
          %1559 = vmatpush1.xpose.msra.mxu0 0.0
          %1560 = vmatprep.subr.mxu0 0.0
          %1561 = vmatpush1.xpose.msra.mxu0 0.0
          %1562 = vmatprep.subr.mxu0 0.0
          %1563 = vmatpush1.xpose.msra.mxu0 0.0
          %1564 = vmatprep.subr.mxu0 0.0
          %1565 = vmatpush1.xpose.msra.mxu0 0.0
          %1566 = vmatprep.subr.mxu0 0.0
          %1567 = vmatpush1.xpose.msra.mxu0 0.0
          %1568 = vmatprep.subr.mxu0 0.0
          %1569 = vmatpush1.xpose.msra.mxu0 0.0
          %1570 = vmatprep.subr.mxu0 0.0
          %1571 = vmatpush1.xpose.msra.mxu0 0.0
          %1572 = vmatprep.subr.mxu0 0.0
          %1573 = vmatpush1.xpose.msra.mxu0 0.0
          %1574 = vmatprep.subr.mxu0 0.0
          %1575 = vmatpush1.xpose.msra.mxu0 %v1542
          %1576 = vmatprep.subr.mxu0 0.0
          %1577 = vmatpush2.xpose.msra.mxu0 0.0
          %1578 = vmatprep.subr.mxu0 0.0
          %1579 = vmatpush2.xpose.msra.mxu0 0.0
          %1580 = vmatprep.subr.mxu0 0.0
          %1581 = vmatpush2.xpose.msra.mxu0 0.0
          %1582 = vmatprep.subr.mxu0 0.0
          %1583 = vmatpush2.xpose.msra.mxu0 0.0
          %1584 = vmatprep.subr.mxu0 0.0
          %1585 = vmatpush2.xpose.msra.mxu0 0.0
          %1586 = vmatprep.subr.mxu0 0.0
          %1587 = vmatpush2.xpose.msra.mxu0 0.0
          %1588 = vmatprep.subr.mxu0 0.0
          %1589 = vmatpush2.xpose.msra.mxu0 0.0
          %1590 = vmatprep.subr.mxu0 0.0
          %1591 = vmatpush2.xpose.msra.mxu0 0.0
          %1592 = vmatprep.subr.mxu0 0.0
          %1593 = vmatpush2.xpose.msra.mxu0 0.0
          %1594 = vmatprep.subr.mxu0 0.0
          %1595 = vmatpush2.xpose.msra.mxu0 0.0
          %1596 = vmatprep.subr.mxu0 0.0
          %1597 = vmatpush2.xpose.msra.mxu0 0.0
          %1598 = vmatprep.subr.mxu0 0.0
          %1599 = vmatpush2.xpose.msra.mxu0 0.0
          %1600 = vmatprep.subr.mxu0 0.0
          %1601 = vmatpush2.xpose.msra.mxu0 0.0
          %1602 = vmatprep.subr.mxu0 0.0
          %1603 = vmatpush2.xpose.msra.mxu0 0.0
          %1604 = vmatprep.subr.mxu0 0.0
          %1605 = vmatpush2.xpose.msra.mxu0 0.0
          %1606 = vmatprep.subr.mxu0 0.0
          %1607 = vmatpush2.xpose.msra.mxu0 0.0
          %1608 = vmatprep.mubr.f32.mxu0 0.0
          %1609 = vmatmul.mubr.f32.gmra.mxu0 %v1539
          %v1610 = vpop.f32.mrf.mxu0
          %v1611 = vadd.f32 0.0, %v1610
          %v1612 = vpop.f32.mrf.mxu0
          %1613 = vdwg.mxu0
          %v1614 = vlaneseq
          %v1615 = vshrl.u32 %v1614, 7
          %v1616 = vsub.s32 0, %v1615
          %v1617 = vrot.slane %v1529, %v1616
          %v1618 = vadd.f32 %v1537, %v1617
          %v1619 = vmul.f32 %v1611, 2.0
          %v1620 = vsub.f32 %v1618, %v1619
          %v1621 = vmax.f32 %v1620, 0.0
          %v1622 = vrsqrt.pop %v1621
          %v1623 = vmul.f32 %v1621, %v1622
          %vm1624 = vcmp.eq.f32.partialorder %v1621, inf
          %v1625 = vsel %vm1624, %v1621, %v1623
          %vm1626 = vcmp.eq.f32.partialorder %v1621, 0.0
          %v1627 = vand.u32 %v1621, 2147483648
          %v1628 = vsel %vm1626, %v1627, %v1625
          %v1629 = vsub.f32 0.0, %v1628
          %vm1630 = vcmask 39936
          %v1631 = vsel %vm1630, %v1629, -inf
          %1632 = vmax.xlane.f32.xlu0 %v1631
          %v1633 = vpop.xlane.xlu0 %1632
          %v1634 = vsub.f32 %v1629, %v1633
          %v1635 = vmul.f32 %v1634, 1.442695
          %v1636 = vpow.pop %v1635
          %v1637 = vsel %vm1630, %v1636, 0.0
          %1638 = vadd.xlane.f32.xlu0 %v1637
          %v1639 = vpop.xlane.xlu0 %1638
          %v1640 = vrcp.pop %v1639
          %v1641 = vmul.f32 %v1636, %v1640
          %1642 = vst.msk [vmem:[#allocation12] sm:$0xff] %vm1630, %v1641
          %v1643 = vmax.f32 %v1537, 1e-12
          %v1644 = vrsqrt.pop %v1643
          %v1645 = vmul.f32 %v1611, %v1644
          %v1646 = vmax.f32 %v1529, 1e-12
          %v1647 = vrsqrt.pop %v1646
          %v1648 = vlaneseq
          %v1649 = vshrl.u32 %v1648, 7
          %v1650 = vsub.s32 0, %v1649
          %v1651 = vrot.slane %v1647, %v1650
          %v1652 = vmul.f32 %v1645, %v1651
          %1653 = vst.msk [vmem:[#allocation13] sm:$0xff] %vm1630, %v1652
        $region71: #{tpu_custom_call.1} parent=58 // pred_fallthru
          _
        // Predicated region
        $region72: #{tpu_custom_call.1} parent=58 // pred_check
          %p1654 = pneg %p159
        $region73: #{tpu_custom_call.1} parent=58 // pred_check_branch
          %1656 = sbr.rel (%p1654) target = $region75
        $region74: #{tpu_custom_call.1} parent=58 // pred_region
          %s1658 = ssub.s32 256, 256
          %1659 = vsyncadd [#allocation6], %s1658
          %s1660 = sshll.u32 [#allocation5], 4
          %s1661 = int_to_ptr.vmem [resolvable:$true] %s1660
          %1666 = dma.vmem_to_hbm [thread:$0]  %s1661, 256, %s5, [#allocation6], 128, 128, 8
        $region75: #{tpu_custom_call.1} parent=58 // pred_fallthru
          _
        // Predicated region
        $region76: #{tpu_custom_call.1} parent=58 // pred_check
          %p1667 = pneg %p180
        $region77: #{tpu_custom_call.1} parent=58 // pred_check_branch
          %1669 = sbr.rel (%p1667) target = $region79
        $region78: #{tpu_custom_call.1} parent=58 // pred_region
          %s1671 = ssub.s32 128, 128
          %1672 = vsyncadd [#allocation8], %s1671
          %s1674 = sshll.u32 [#allocation7], 4
          %s1675 = int_to_ptr.vmem [resolvable:$true] %s1674
          %1677 = dma.vmem_to_hbm [thread:$0]  %s1675, 128, %s6, [#allocation8]
        $region79: #{tpu_custom_call.1} parent=58 // pred_fallthru
          _
        // Predicated region
        $region80: #{tpu_custom_call.1} parent=58 // pred_check
          %p1678 = pneg %p201
        $region81: #{tpu_custom_call.1} parent=58 // pred_check_branch
          %1680 = sbr.rel (%p1678) target = $region83
        $region82: #{tpu_custom_call.1} parent=58 // pred_region
          %s1682 = ssub.s32 16, 16
          %1683 = vsyncadd [#allocation8], %s1682
          %s1685 = sshll.u32 [#allocation9], 4
          %s1686 = int_to_ptr.vmem [resolvable:$true] %s1685
          %1688 = dma.vmem_to_hbm [thread:$0]  %s1686, 16, %s7, [#allocation8]
        $region83: #{tpu_custom_call.1} parent=58 // pred_fallthru
          _
        // Predicated region
        $region84: #{tpu_custom_call.1} parent=58 // pred_check
          %p1689 = pneg %p222
        $region85: #{tpu_custom_call.1} parent=58 // pred_check_branch
          %1691 = sbr.rel (%p1689) target = $region87
        $region86: #{tpu_custom_call.1} parent=58 // pred_region
          %s1693 = ssub.s32 128, 128
          %1694 = vsyncadd [#allocation11], %s1693
          %s1696 = sshll.u32 [#allocation10], 4
          %s1697 = int_to_ptr.vmem [resolvable:$true] %s1696
          %1699 = dma.vmem_to_hbm [thread:$0]  %s1697, 128, %s8, [#allocation11]
        $region87: #{tpu_custom_call.1} parent=58 // pred_fallthru
          _
        // Predicated region
        $region88: #{tpu_custom_call.1} parent=58 // pred_check
          %p1700 = pneg %p243
        $region89: #{tpu_custom_call.1} parent=58 // pred_check_branch
          %1702 = sbr.rel (%p1700) target = $region91
        $region90: #{tpu_custom_call.1} parent=58 // pred_region
          %s1704 = ssub.s32 128, 128
          %1705 = vsyncadd [#allocation11], %s1704
          %s1707 = sshll.u32 [#allocation12], 4
          %s1708 = int_to_ptr.vmem [resolvable:$true] %s1707
          %1710 = dma.vmem_to_hbm [thread:$0]  %s1708, 128, %s9, [#allocation11]
        $region91: #{tpu_custom_call.1} parent=58 // pred_fallthru
          _
        // Predicated region
        $region92: #{tpu_custom_call.1} parent=58 // pred_check
          %p1711 = pneg %p264
        $region93: #{tpu_custom_call.1} parent=58 // pred_check_branch
          %1713 = sbr.rel (%p1711) target = $region95
        $region94: #{tpu_custom_call.1} parent=58 // pred_region
          %s1715 = ssub.s32 128, 128
          %1716 = vsyncadd [#allocation14], %s1715
          %s1718 = sshll.u32 [#allocation13], 4
          %s1719 = int_to_ptr.vmem [resolvable:$true] %s1718
          %1721 = dma.vmem_to_hbm [thread:$0]  %s1719, 128, %s10, [#allocation14]
        $region95: #{tpu_custom_call.1} parent=58 // pred_fallthru
          _
        // Predicated region
        $region96: #{tpu_custom_call.1} parent=58 // pred_check
          %p1722 = pneg %p159
        $region97: #{tpu_custom_call.1} parent=58 // pred_check_branch
          %1724 = sbr.rel (%p1722) target = $region99
        $region98: #{tpu_custom_call.1} parent=58 // pred_region
          %1725 = dma.done [#allocation6], 256
        $region99: #{tpu_custom_call.1} parent=58 // pred_fallthru
          _
        // Predicated region
        $region100: #{tpu_custom_call.1} parent=58 // pred_check
          %p1726 = pneg %p180
        $region101: #{tpu_custom_call.1} parent=58 // pred_check_branch
          %1728 = sbr.rel (%p1726) target = $region103
        $region102: #{tpu_custom_call.1} parent=58 // pred_region
          %1729 = dma.done [#allocation8], 128
        $region103: #{tpu_custom_call.1} parent=58 // pred_fallthru
          _
        // Predicated region
        $region104: #{tpu_custom_call.1} parent=58 // pred_check
          %p1730 = pneg %p201
        $region105: #{tpu_custom_call.1} parent=58 // pred_check_branch
          %1732 = sbr.rel (%p1730) target = $region107
        $region106: #{tpu_custom_call.1} parent=58 // pred_region
          %1733 = dma.done [#allocation8], 16
        $region107: #{tpu_custom_call.1} parent=58 // pred_fallthru
          _
        // Predicated region
        $region108: #{tpu_custom_call.1} parent=58 // pred_check
          %p1734 = pneg %p222
        $region109: #{tpu_custom_call.1} parent=58 // pred_check_branch
          %1736 = sbr.rel (%p1734) target = $region111
        $region110: #{tpu_custom_call.1} parent=58 // pred_region
          %1737 = dma.done [#allocation11], 128
        $region111: #{tpu_custom_call.1} parent=58 // pred_fallthru
          _
        // Predicated region
        $region112: #{tpu_custom_call.1} parent=58 // pred_check
          %p1738 = pneg %p243
        $region113: #{tpu_custom_call.1} parent=58 // pred_check_branch
          %1740 = sbr.rel (%p1738) target = $region115
        $region114: #{tpu_custom_call.1} parent=58 // pred_region
          %1741 = dma.done [#allocation11], 128
        $region115: #{tpu_custom_call.1} parent=58 // pred_fallthru
          _
        // Predicated region
        $region116: #{tpu_custom_call.1} parent=58 // pred_check
          %p1742 = pneg %p264
        $region117: #{tpu_custom_call.1} parent=58 // pred_check_branch
          %1744 = sbr.rel (%p1742) target = $region119
        $region118: #{tpu_custom_call.1} parent=58 // pred_region
          %1745 = dma.done [#allocation14], 128
        $region119: #{tpu_custom_call.1} parent=58 // pred_fallthru
          _
      $region59: #{tpu_custom_call.1} parent=5 // pred_fallthru
        _
      %p1746 = scmp.le.s32.totalorder 2, %s21
      // Predicated region
      $region120: #{tpu_custom_call.1} parent=5 // pred_check
        %p1747 = pneg %p1746
      $region121: #{tpu_custom_call.1} parent=5 // pred_check_branch
        %1749 = sbr.rel (%p1747) target = $region123
      $region122: #{tpu_custom_call.1} parent=5 // pred_region
        %s1750 = ssub.s32 %s21, 2
      $region123: #{tpu_custom_call.1} parent=5 // pred_fallthru
        _
    $region6: #{tpu_custom_call.1} parent=1 // loop_footer
      %s25 = sadd.s32 1, %s21
    $region7: #{tpu_custom_call.1} parent=1 // loop_footer_branch
      %20 = sbr.rel target = $region3
    $region8: #{tpu_custom_call.1} parent=1 // loop_exit
      _
    %1751 = vsyncpa [#allocation6], 1
    %s1752 = scalar_lea.sflag [#allocation6], 1
    %1753 = vsyncpa %s1752, 1
    %1754 = vsyncpa [#allocation8], 1
    %1755 = vsyncpa [#allocation11], 1
    %1756 = vsyncpa [#allocation14], 1

</llo_original>
